<compile_context>
chip_gen: v6e
topology: v6e:2x2x1
jax: 0.10.0
libtpu: 0.0.40
codegen_flags: <defaults>
</compile_context>

<pallas_src>
import functools

import jax
import jax.numpy as jnp
from jax.experimental import pallas as pl
from jax.experimental.pallas import tpu as pltpu

EPS = 1e-5
LANE = 128


def _round_up(x, m):
    return (x + m - 1) // m * m


# --------------- pass 1: conv (tap-folded matmul) + BN statistics ------------

def conv_stats_kernel(x_ref, w_ref, y_ref, sum_ref, sq_ref):
    # x_ref:   (tile_m, Kpad)   bf16   im2col tile (taps folded into K)
    # w_ref:   (Kpad, tile_c)   bf16
    # y_ref:   (tile_m, tile_c) f32    conv output (pre-BN)
    # sum_ref / sq_ref: (1, tile_c) f32  resident accumulators over the M axis
    i = pl.program_id(1)  # M-tile index (innermost, "arbitrary" axis)

    @pl.when(i == 0)
    def _():
        sum_ref[...] = jnp.zeros_like(sum_ref)
        sq_ref[...] = jnp.zeros_like(sq_ref)

    y = jnp.dot(x_ref[...], w_ref[...], preferred_element_type=jnp.float32)
    y_ref[...] = y
    sum_ref[...] += jnp.sum(y, axis=0, keepdims=True)
    sq_ref[...] += jnp.sum(y * y, axis=0, keepdims=True)


def _conv_stats(xcol, wmat, tile_m, tile_c):
    Mpad, Kpad = xcol.shape
    Cpad = wmat.shape[1]
    grid = (Cpad // tile_c, Mpad // tile_m)   # (Cout tiles, M tiles), M innermost
    return pl.pallas_call(
        conv_stats_kernel,
        out_shape=(
            jax.ShapeDtypeStruct((Mpad, Cpad), jnp.float32),
            jax.ShapeDtypeStruct((1, Cpad), jnp.float32),
            jax.ShapeDtypeStruct((1, Cpad), jnp.float32),
        ),
        grid=grid,
        in_specs=[
            pl.BlockSpec((tile_m, Kpad), lambda j, i: (i, 0)),
            pl.BlockSpec((Kpad, tile_c), lambda j, i: (0, j)),
        ],
        out_specs=(
            pl.BlockSpec((tile_m, tile_c), lambda j, i: (i, j)),
            pl.BlockSpec((1, tile_c), lambda j, i: (0, j)),
            pl.BlockSpec((1, tile_c), lambda j, i: (0, j)),
        ),
        compiler_params=pltpu.CompilerParams(
            dimension_semantics=("parallel", "arbitrary")),
    )(xcol, wmat)


# ------------------- pass 2: normalize (scale/shift) + ReLU ------------------

def bn_relu_kernel(y_ref, scale_ref, shift_ref, o_ref):
    o_ref[...] = jnp.maximum(
        y_ref[...] * scale_ref[...] + shift_ref[...], 0.0
    ).astype(o_ref.dtype)


def _bn_relu(y, scale, shift, tile_m, tile_c, out_dtype):
    Mpad, Cpad = y.shape
    grid = (Cpad // tile_c, Mpad // tile_m)
    return pl.pallas_call(
        bn_relu_kernel,
        out_shape=jax.ShapeDtypeStruct((Mpad, Cpad), out_dtype),
        grid=grid,
        in_specs=[
            pl.BlockSpec((tile_m, tile_c), lambda j, i: (i, j)),
            pl.BlockSpec((1, tile_c), lambda j, i: (0, j)),
            pl.BlockSpec((1, tile_c), lambda j, i: (0, j)),
        ],
        out_specs=pl.BlockSpec((tile_m, tile_c), lambda j, i: (i, j)),
        compiler_params=pltpu.CompilerParams(
            dimension_semantics=("parallel", "parallel")),
    )(y, scale, shift)


# ------------------------------ layer wrapper --------------------------------

def _im2col_folded(x_nhwc):
    # Glue only (no FLOPs): 3x3 / pad=1 taps folded along the channel axis.
    N, H, W, C = x_nhwc.shape
    xp = jnp.pad(x_nhwc, ((0, 0), (1, 1), (1, 1), (0, 0)))
    taps = [xp[:, ky:ky + H, kx:kx + W, :] for ky in range(3) for kx in range(3)]
    return jnp.concatenate(taps, axis=-1).reshape(N * H * W, 9 * C)


def _conv_bn_relu_layer(x_nhwc, w_oihw, gamma, beta, *, tile_m, out_dtype):
    N, H, W, Cin = x_nhwc.shape
    Cout = w_oihw.shape[0]
    M = N * H * W
    K = 9 * Cin
    Kpad = _round_up(K, LANE)          # lane-dense contraction (>=128)
    Cpad = _round_up(Cout, LANE)       # lane-dense output stores
    tile_c = LANE
    tm = min(tile_m, _round_up(M, 8))  # sublane-aligned M tile
    Mpad = _round_up(M, tm)

    # im2col with taps folded into K; zero row/col padding is stat-neutral
    # (zero rows contribute 0 to sum and sumsq; we divide by the real M).
    xcol = _im2col_folded(x_nhwc)
    xcol = jnp.pad(xcol, ((0, Mpad - M), (0, Kpad - K))).astype(jnp.bfloat16)

    # (Cout, Cin, 3, 3) -> (ky, kx, Cin, Cout) -> (9*Cin, Cout), padded, bf16.
    # Conv bias is intentionally dropped: it cancels under the BN mean.
    wmat = jnp.transpose(w_oihw, (2, 3, 1, 0)).reshape(K, Cout)
    wmat = jnp.pad(wmat, ((0, Kpad - K), (0, Cpad - Cout))).astype(jnp.bfloat16)

    y, ch_sum, ch_sq = _conv_stats(xcol, wmat, tm, tile_c)

    # Tiny per-channel math (Cpad values) in plain JAX: fold BN into scale/shift.
    mean = ch_sum[0] / M
    var = jnp.maximum(ch_sq[0] / M - mean * mean, 0.0)   # single-pass variance
    inv = jax.lax.rsqrt(var + EPS)
    g = jnp.pad(gamma, (0, Cpad - Cout))
    b = jnp.pad(beta, (0, Cpad - Cout))
    scale = (g * inv)[None, :].astype(jnp.float32)
    shift = (b - mean * g * inv)[None, :].astype(jnp.float32)

    out = _bn_relu(y, scale, shift, tm, tile_c, out_dtype)
    return out[:M, :Cout].reshape(N, H, W, Cout)


@functools.partial(jax.jit, static_argnames=("tile_m",))
def unet_block_forward(x_nchw, params, tile_m=256):
    x = jnp.transpose(x_nchw, (0, 2, 3, 1)).astype(jnp.float32)   # NCHW -> NHWC
    # Layer 1: intermediate h stays bf16 (it only feeds the next bf16 matmul).
    h = _conv_bn_relu_layer(x, params["w1"], params["g1"], params["beta1"],
                            tile_m=tile_m, out_dtype=jnp.bfloat16)
    # Layer 2: final output in f32.
    y = _conv_bn_relu_layer(h, params["w2"], params["g2"], params["beta2"],
                            tile_m=tile_m, out_dtype=jnp.float32)
    return jnp.transpose(y, (0, 3, 1, 2))                         # back to NCHW


# ------------------------------ pure-JAX reference ---------------------------

def reference_forward(x_nchw, params):
    def conv(x, w, b):
        y = jax.lax.conv_general_dilated(
            x, w, window_strides=(1, 1), padding="SAME",
            dimension_numbers=("NCHW", "OIHW", "NCHW"))
        return y + b[None, :, None, None]

    def bn_relu(x, g, beta):
        mean = jnp.mean(x, axis=(0, 2, 3), keepdims=True)
        var = jnp.mean((x - mean) ** 2, axis=(0, 2, 3), keepdims=True)
        y = (x - mean) * jax.lax.rsqrt(var + EPS)
        y = y * g[None, :, None, None] + beta[None, :, None, None]
        return jnp.maximum(y, 0.0)

    h = bn_relu(conv(x_nchw, params["w1"], params["b1"]),
                params["g1"], params["beta1"])
    return bn_relu(conv(h, params["w2"], params["b2"]),
                   params["g2"], params["beta2"])


if __name__ == "__main__":
    N, Cin, Cout, H, W = 2, 4, 8, 16, 16
    key = jax.random.PRNGKey(0)
    ks = jax.random.split(key, 9)

    x = jax.random.normal(ks[0], (N, Cin, H, W), jnp.float32)
    params = dict(
        w1=jax.random.normal(ks[1], (Cout, Cin, 3, 3), jnp.float32) * 0.1,
        b1=jax.random.normal(ks[2], (Cout,), jnp.float32) * 0.1,   # cancels in BN
        g1=1.0 + 0.1 * jax.random.normal(ks[3], (Cout,), jnp.float32),
        beta1=0.1 * jax.random.normal(ks[4], (Cout,), jnp.float32),
        w2=jax.random.normal(ks[5], (Cout, Cout, 3, 3), jnp.float32) * 0.1,
        b2=jax.random.normal(ks[6], (Cout,), jnp.float32) * 0.1,   # cancels in BN
        g2=1.0 + 0.1 * jax.random.normal(ks[7], (Cout,), jnp.float32),
        beta2=0.1 * jax.random.normal(ks[8], (Cout,), jnp.float32),
    )

    out = unet_block_forward(x, params)
    out = jax.block_until_ready(out)

    ref = reference_forward(x, params)
    assert out.shape == (N, Cout, H, W), out.shape
    max_err = float(jnp.max(jnp.abs(out - ref)))
    # Tolerance sized for bf16 MXU inputs through two conv+BN layers
    # (f32 accumulation and f32 batch statistics).
    assert jnp.allclose(out, ref, rtol=2e-2, atol=5e-2), max_err
    print("KERNEL_OK")
</pallas_src>

<mosaic_0001>
module attributes {stable_mosaic.version = 11 : i64} {
  func.func @conv_stats_kernel(%arg0: i32, %arg1: i32, %arg2: memref<256x128xbf16, #tpu.memory_space<vmem>>, %arg3: memref<128x128xbf16, #tpu.memory_space<vmem>>, %arg4: memref<256x128xf32, #tpu.memory_space<vmem>>, %arg5: memref<1x128xf32, #tpu.memory_space<vmem>>, %arg6: memref<1x128xf32, #tpu.memory_space<vmem>>) attributes {dimension_semantics = [#tpu.dimension_semantics<parallel>, #tpu.dimension_semantics<arbitrary>], iteration_bounds = array<i64: 1, 2>, scalar_prefetch = 0 : i64, scratch_operands = 0 : i64, tpu.core_type = #tpu.core_type<tc>, window_params = [{transform_indices = @transform_0, window_bounds = array<i64: 256, 128>}, {transform_indices = @transform_1, window_bounds = array<i64: 128, 128>}, {transform_indices = @transform_2, window_bounds = array<i64: 256, 128>}, {transform_indices = @transform_3, window_bounds = array<i64: 1, 128>}, {transform_indices = @transform_4, window_bounds = array<i64: 1, 128>}]} {
    %c0_i32 = arith.constant 0 : i32
    %0 = arith.cmpi eq, %arg1, %c0_i32 : i32
    %1 = arith.extui %0 : i1 to i32
    %c0_i32_0 = arith.constant 0 : i32
    %2 = arith.cmpi ne, %1, %c0_i32_0 : i32
    scf.if %2 {
      %cst_16 = arith.constant 0.000000e+00 : f32
      %18 = vector.broadcast %cst_16 : f32 to vector<1x128xf32>
      %c0_17 = arith.constant 0 : index
      %c0_18 = arith.constant 0 : index
      %19 = vector.load %arg5[%c0_17, %c0_18] : memref<1x128xf32, #tpu.memory_space<vmem>>, vector<1x128xf32>
      tpu.vector_store %arg5[%c0_17, %c0_18], %18 {strides = array<i32>} : memref<1x128xf32, #tpu.memory_space<vmem>>, vector<1x128xf32>,
      %cst_19 = arith.constant 0.000000e+00 : f32
      %20 = vector.broadcast %cst_19 : f32 to vector<1x128xf32>
      %c0_20 = arith.constant 0 : index
      %c0_21 = arith.constant 0 : index
      %21 = vector.load %arg6[%c0_20, %c0_21] : memref<1x128xf32, #tpu.memory_space<vmem>>, vector<1x128xf32>
      tpu.vector_store %arg6[%c0_20, %c0_21], %20 {strides = array<i32>} : memref<1x128xf32, #tpu.memory_space<vmem>>, vector<1x128xf32>,
    } else {
    }
    %c0 = arith.constant 0 : index
    %c0_1 = arith.constant 0 : index
    %3 = vector.load %arg2[%c0, %c0_1] : memref<256x128xbf16, #tpu.memory_space<vmem>>, vector<256x128xbf16>
    %c0_2 = arith.constant 0 : index
    %c0_3 = arith.constant 0 : index
    %4 = vector.load %arg3[%c0_2, %c0_3] : memref<128x128xbf16, #tpu.memory_space<vmem>>, vector<128x128xbf16>
    %cst = arith.constant dense<0.000000e+00> : vector<256x128xf32>
    %5 = tpu.matmul %3, %4, %cst {dimension_numbers = #tpu.dot_dimension_numbers<[1], [0], [0], [1], [0, 0, 1, 1], [], []>} : vector<256x128xbf16>, vector<128x128xbf16>, vector<256x128xf32> -> vector<256x128xf32>
    %c0_4 = arith.constant 0 : index
    %c0_5 = arith.constant 0 : index
    %6 = vector.load %arg4[%c0_4, %c0_5] : memref<256x128xf32, #tpu.memory_space<vmem>>, vector<256x128xf32>
    tpu.vector_store %arg4[%c0_4, %c0_5], %5 {strides = array<i32>} : memref<256x128xf32, #tpu.memory_space<vmem>>, vector<256x128xf32>,
    %c0_6 = arith.constant 0 : index
    %c0_7 = arith.constant 0 : index
    %7 = vector.load %arg5[%c0_6, %c0_7] : memref<1x128xf32, #tpu.memory_space<vmem>>, vector<1x128xf32>
    %cst_8 = arith.constant dense<0.000000e+00> : vector<128xf32>
    %8 = vector.multi_reduction <add>, %5, %cst_8 [0] : vector<256x128xf32> to vector<128xf32>
    %9 = vector.shape_cast %8 : vector<128xf32> to vector<1x128xf32>
    %10 = arith.addf %7, %9 : vector<1x128xf32>
    %c0_9 = arith.constant 0 : index
    %c0_10 = arith.constant 0 : index
    %11 = vector.load %arg5[%c0_9, %c0_10] : memref<1x128xf32, #tpu.memory_space<vmem>>, vector<1x128xf32>
    tpu.vector_store %arg5[%c0_9, %c0_10], %10 {strides = array<i32>} : memref<1x128xf32, #tpu.memory_space<vmem>>, vector<1x128xf32>,
    %c0_11 = arith.constant 0 : index
    %c0_12 = arith.constant 0 : index
    %12 = vector.load %arg6[%c0_11, %c0_12] : memref<1x128xf32, #tpu.memory_space<vmem>>, vector<1x128xf32>
    %13 = arith.mulf %5, %5 : vector<256x128xf32>
    %cst_13 = arith.constant dense<0.000000e+00> : vector<128xf32>
    %14 = vector.multi_reduction <add>, %13, %cst_13 [0] : vector<256x128xf32> to vector<128xf32>
    %15 = vector.shape_cast %14 : vector<128xf32> to vector<1x128xf32>
    %16 = arith.addf %12, %15 : vector<1x128xf32>
    %c0_14 = arith.constant 0 : index
    %c0_15 = arith.constant 0 : index
    %17 = vector.load %arg6[%c0_14, %c0_15] : memref<1x128xf32, #tpu.memory_space<vmem>>, vector<1x128xf32>
    tpu.vector_store %arg6[%c0_14, %c0_15], %16 {strides = array<i32>} : memref<1x128xf32, #tpu.memory_space<vmem>>, vector<1x128xf32>,
    return
  }
  func.func @transform_0(%arg0: i32, %arg1: i32) -> (i32, i32) {
    %c0_i32 = arith.constant 0 : i32
    %c0_i32_0 = arith.constant 0 : i32
    return %arg1, %c0_i32 : i32, i32
  }
  func.func @transform_1(%arg0: i32, %arg1: i32) -> (i32, i32) {
    %c0_i32 = arith.constant 0 : i32
    %c0_i32_0 = arith.constant 0 : i32
    return %c0_i32, %arg0 : i32, i32
  }
  func.func @transform_2(%arg0: i32, %arg1: i32) -> (i32, i32) {
    %c0_i32 = arith.constant 0 : i32
    return %arg1, %arg0 : i32, i32
  }
  func.func @transform_3(%arg0: i32, %arg1: i32) -> (i32, i32) {
    %c0_i32 = arith.constant 0 : i32
    %c0_i32_0 = arith.constant 0 : i32
    return %c0_i32, %arg0 : i32, i32
  }
  func.func @transform_4(%arg0: i32, %arg1: i32) -> (i32, i32) {
    %c0_i32 = arith.constant 0 : i32
    %c0_i32_0 = arith.constant 0 : i32
    return %c0_i32, %arg0 : i32, i32
  }
}

module attributes {stable_mosaic.version = 11 : i64} {
  func.func @bn_relu_kernel(%arg0: i32, %arg1: i32, %arg2: memref<256x128xf32, #tpu.memory_space<vmem>>, %arg3: memref<1x128xf32, #tpu.memory_space<vmem>>, %arg4: memref<1x128xf32, #tpu.memory_space<vmem>>, %arg5: memref<256x128xbf16, #tpu.memory_space<vmem>>) attributes {dimension_semantics = [#tpu.dimension_semantics<parallel>, #tpu.dimension_semantics<parallel>], iteration_bounds = array<i64: 1, 2>, scalar_prefetch = 0 : i64, scratch_operands = 0 : i64, tpu.core_type = #tpu.core_type<tc>, window_params = [{transform_indices = @transform_0, window_bounds = array<i64: 256, 128>}, {transform_indices = @transform_1, window_bounds = array<i64: 1, 128>}, {transform_indices = @transform_2, window_bounds = array<i64: 1, 128>}, {transform_indices = @transform_3, window_bounds = array<i64: 256, 128>}]} {
    %c0 = arith.constant 0 : index
    %c0_0 = arith.constant 0 : index
    %0 = vector.load %arg2[%c0, %c0_0] : memref<256x128xf32, #tpu.memory_space<vmem>>, vector<256x128xf32>
    %c0_1 = arith.constant 0 : index
    %c0_2 = arith.constant 0 : index
    %1 = vector.load %arg3[%c0_1, %c0_2] : memref<1x128xf32, #tpu.memory_space<vmem>>, vector<1x128xf32>
    %2 = vector.broadcast %1 : vector<1x128xf32> to vector<256x128xf32>
    %3 = arith.mulf %0, %2 : vector<256x128xf32>
    %c0_3 = arith.constant 0 : index
    %c0_4 = arith.constant 0 : index
    %4 = vector.load %arg4[%c0_3, %c0_4] : memref<1x128xf32, #tpu.memory_space<vmem>>, vector<1x128xf32>
    %5 = vector.broadcast %4 : vector<1x128xf32> to vector<256x128xf32>
    %6 = arith.addf %3, %5 : vector<256x128xf32>
    %cst = arith.constant 0.000000e+00 : f32
    %7 = vector.broadcast %cst : f32 to vector<256x128xf32>
    %8 = arith.maximumf %6, %7 : vector<256x128xf32>
    %9 = arith.truncf %8 : vector<256x128xf32> to vector<256x128xbf16>
    %c0_5 = arith.constant 0 : index
    %c0_6 = arith.constant 0 : index
    %10 = vector.load %arg5[%c0_5, %c0_6] : memref<256x128xbf16, #tpu.memory_space<vmem>>, vector<256x128xbf16>
    tpu.vector_store %arg5[%c0_5, %c0_6], %9 {strides = array<i32>} : memref<256x128xbf16, #tpu.memory_space<vmem>>, vector<256x128xbf16>,
    return
  }
  func.func @transform_0(%arg0: i32, %arg1: i32) -> (i32, i32) {
    %c0_i32 = arith.constant 0 : i32
    return %arg1, %arg0 : i32, i32
  }
  func.func @transform_1(%arg0: i32, %arg1: i32) -> (i32, i32) {
    %c0_i32 = arith.constant 0 : i32
    %c0_i32_0 = arith.constant 0 : i32
    return %c0_i32, %arg0 : i32, i32
  }
  func.func @transform_2(%arg0: i32, %arg1: i32) -> (i32, i32) {
    %c0_i32 = arith.constant 0 : i32
    %c0_i32_0 = arith.constant 0 : i32
    return %c0_i32, %arg0 : i32, i32
  }
  func.func @transform_3(%arg0: i32, %arg1: i32) -> (i32, i32) {
    %c0_i32 = arith.constant 0 : i32
    return %arg1, %arg0 : i32, i32
  }
}

module attributes {stable_mosaic.version = 11 : i64} {
  func.func @bn_relu_kernel(%arg0: i32, %arg1: i32, %arg2: memref<256x128xf32, #tpu.memory_space<vmem>>, %arg3: memref<1x128xf32, #tpu.memory_space<vmem>>, %arg4: memref<1x128xf32, #tpu.memory_space<vmem>>, %arg5: memref<256x128xf32, #tpu.memory_space<vmem>>) attributes {dimension_semantics = [#tpu.dimension_semantics<parallel>, #tpu.dimension_semantics<parallel>], iteration_bounds = array<i64: 1, 2>, scalar_prefetch = 0 : i64, scratch_operands = 0 : i64, tpu.core_type = #tpu.core_type<tc>, window_params = [{transform_indices = @transform_0, window_bounds = array<i64: 256, 128>}, {transform_indices = @transform_1, window_bounds = array<i64: 1, 128>}, {transform_indices = @transform_2, window_bounds = array<i64: 1, 128>}, {transform_indices = @transform_3, window_bounds = array<i64: 256, 128>}]} {
    %c0 = arith.constant 0 : index
    %c0_0 = arith.constant 0 : index
    %0 = vector.load %arg2[%c0, %c0_0] : memref<256x128xf32, #tpu.memory_space<vmem>>, vector<256x128xf32>
    %c0_1 = arith.constant 0 : index
    %c0_2 = arith.constant 0 : index
    %1 = vector.load %arg3[%c0_1, %c0_2] : memref<1x128xf32, #tpu.memory_space<vmem>>, vector<1x128xf32>
    %2 = vector.broadcast %1 : vector<1x128xf32> to vector<256x128xf32>
    %3 = arith.mulf %0, %2 : vector<256x128xf32>
    %c0_3 = arith.constant 0 : index
    %c0_4 = arith.constant 0 : index
    %4 = vector.load %arg4[%c0_3, %c0_4] : memref<1x128xf32, #tpu.memory_space<vmem>>, vector<1x128xf32>
    %5 = vector.broadcast %4 : vector<1x128xf32> to vector<256x128xf32>
    %6 = arith.addf %3, %5 : vector<256x128xf32>
    %cst = arith.constant 0.000000e+00 : f32
    %7 = vector.broadcast %cst : f32 to vector<256x128xf32>
    %8 = arith.maximumf %6, %7 : vector<256x128xf32>
    %c0_5 = arith.constant 0 : index
    %c0_6 = arith.constant 0 : index
    %9 = vector.load %arg5[%c0_5, %c0_6] : memref<256x128xf32, #tpu.memory_space<vmem>>, vector<256x128xf32>
    tpu.vector_store %arg5[%c0_5, %c0_6], %8 {strides = array<i32>} : memref<256x128xf32, #tpu.memory_space<vmem>>, vector<256x128xf32>,
    return
  }
  func.func @transform_0(%arg0: i32, %arg1: i32) -> (i32, i32) {
    %c0_i32 = arith.constant 0 : i32
    return %arg1, %arg0 : i32, i32
  }
  func.func @transform_1(%arg0: i32, %arg1: i32) -> (i32, i32) {
    %c0_i32 = arith.constant 0 : i32
    %c0_i32_0 = arith.constant 0 : i32
    return %c0_i32, %arg0 : i32, i32
  }
  func.func @transform_2(%arg0: i32, %arg1: i32) -> (i32, i32) {
    %c0_i32 = arith.constant 0 : i32
    %c0_i32_0 = arith.constant 0 : i32
    return %c0_i32, %arg0 : i32, i32
  }
  func.func @transform_3(%arg0: i32, %arg1: i32) -> (i32, i32) {
    %c0_i32 = arith.constant 0 : i32
    return %arg1, %arg0 : i32, i32
  }
}

</mosaic_0001>

<llo_original>
// kernel: unet_block_forward.5
$region0: #{unet_block_forward.5}
  #allocation0 [shape = 'u32[]', space=smem, size = 0x4, offset = 0x4, fixed_abs, tag = 'smem constant byte address 0x4 - core index']
  #allocation1 [shape = 'u32[144,128]{1,0:T(1,128)}', space=vmem, size = 0x12000, scoped, tag = 'internal scratch']
  %s0 = inlined_call_operand.vmem [shape: f32[512,128], index: 0, kind: input, shape index: {}]
  %s1 = inlined_call_operand.vmem [shape: f32[1,128], index: 1, kind: input, shape index: {}]
  %s2 = inlined_call_operand.vmem [shape: f32[1,128], index: 2, kind: input, shape index: {}]
  %s3 = inlined_call_operand.vmem [shape: bf16[512,128], index: 3, kind: output, shape index: {}]
  %s4 = sld [smem:[#allocation0]]
  $region45: #{unet_block_forward.5} parent=0
    _
  %s6 = ssub.s32 1, %s4
  %s7 = scalar_select 0, %s6, %s4
  loop: start=0, step=1, limit=4
  $region2: #{unet_block_forward.5} parent=0 // loop_pre_header
    _
  $region3: #{unet_block_forward.5} parent=0 // loop_header
    %s9 = sphi 0, %s13
    %p10 = scmp.ge.s32.totalorder %s9, 4
    %s16 = sphi 0, %s28
    %s17 = sphi 0, %s24
    %s18 = sphi 0, %s16
    %s19 = sphi 0, %s17
    %s20 = sphi 0, %s18
    %s21 = sphi 0, %s19
    %s33 = sphi 0, %s35
    %s36 = sphi 0, %s33
    %s37 = sphi 0, %s36
    %s53 = sphi 0, %s37
    %s59 = sphi 0, %s61
    %s62 = sphi 0, %s59
    %s63 = sphi 0, %s62
    %s79 = sphi 0, %s63
    %s85 = sphi 0, %s87
    %s88 = sphi 0, %s85
    %s89 = sphi 0, %s88
    %s105 = sphi 0, %s89
    %s113 = sphi 0, %s115
    %s116 = sphi 0, %s113
    %s117 = sphi 0, %s116
    %s133 = sphi 0, %s117
  $region4: #{unet_block_forward.5} parent=0 // loop_header_branch
    %12 = sbr.rel (%p10) target = $region8
  $region5: #{unet_block_forward.5} parent=0 // loop_body
    %s14 = ssub.s32 %s9, 1
    %s15 = ssub.s32 %s9, 2
    %s22 = sadd.s32 1, %s17
    %p23 = scmp.ge.s32.totalorder %s22, 2
    %s24 = scalar_select %p23, 0, %s22
    %s25 = sadd.s32 1, %s16
    %s26 = scalar_select %p23, %s25, %s16
    %p27 = scmp.ge.s32.totalorder %s26, 1
    %s28 = scalar_select %p27, 0, %s26
    %s29 = ssub.s32 %s17, %s24
    %s30 = ssub.s32 %s16, %s28
    %s31 = sor.u32 %s29, %s30
    %p32 = scmp.eq.s32.totalorder %s31, 0
    %s34 = sadd.s32 %s33, 1
    %s35 = scalar_select %p32, %s33, %s34
    %p38 = pneg %p32
    %p39 = scmp.eq.s32.totalorder %s9, 1
    %p40 = por %p38, %p39
    %p41 = scmp.ne.s32.totalorder %s33, %s36
    %p42 = scmp.eq.s32.totalorder %s9, 0
    %p43 = por %p41, %p42
    %p44 = scmp.ne.s32.totalorder %s33, %s36
    %p45 = scmp.eq.s32.totalorder %s14, 1
    %p46 = por %p44, %p45
    %p47 = scmp.ne.s32.totalorder %s36, %s37
    %p48 = scmp.eq.s32.totalorder %s14, 0
    %p49 = por %p47, %p48
    %p50 = scmp.ne.s32.totalorder %s36, %s37
    %p51 = scmp.eq.s32.totalorder %s15, 1
    %p52 = por %p50, %p51
    %p54 = scmp.ne.s32.totalorder %s37, %s53
    %p55 = scmp.eq.s32.totalorder %s15, 0
    %p56 = por %p54, %p55
    %s57 = ssub.s32 %s16, %s28
    %p58 = scmp.eq.s32.totalorder %s57, 0
    %s60 = sadd.s32 %s59, 1
    %s61 = scalar_select %p58, %s59, %s60
    %p64 = pneg %p58
    %p65 = scmp.eq.s32.totalorder %s9, 1
    %p66 = por %p64, %p65
    %p67 = scmp.ne.s32.totalorder %s59, %s62
    %p68 = scmp.eq.s32.totalorder %s9, 0
    %p69 = por %p67, %p68
    %p70 = scmp.ne.s32.totalorder %s59, %s62
    %p71 = scmp.eq.s32.totalorder %s14, 1
    %p72 = por %p70, %p71
    %p73 = scmp.ne.s32.totalorder %s62, %s63
    %p74 = scmp.eq.s32.totalorder %s14, 0
    %p75 = por %p73, %p74
    %p76 = scmp.ne.s32.totalorder %s62, %s63
    %p77 = scmp.eq.s32.totalorder %s15, 1
    %p78 = por %p76, %p77
    %p80 = scmp.ne.s32.totalorder %s63, %s79
    %p81 = scmp.eq.s32.totalorder %s15, 0
    %p82 = por %p80, %p81
    %s83 = ssub.s32 %s16, %s28
    %p84 = scmp.eq.s32.totalorder %s83, 0
    %s86 = sadd.s32 %s85, 1
    %s87 = scalar_select %p84, %s85, %s86
    %p90 = pneg %p84
    %p91 = scmp.eq.s32.totalorder %s9, 1
    %p92 = por %p90, %p91
    %p93 = scmp.ne.s32.totalorder %s85, %s88
    %p94 = scmp.eq.s32.totalorder %s9, 0
    %p95 = por %p93, %p94
    %p96 = scmp.ne.s32.totalorder %s85, %s88
    %p97 = scmp.eq.s32.totalorder %s14, 1
    %p98 = por %p96, %p97
    %p99 = scmp.ne.s32.totalorder %s88, %s89
    %p100 = scmp.eq.s32.totalorder %s14, 0
    %p101 = por %p99, %p100
    %p102 = scmp.ne.s32.totalorder %s88, %s89
    %p103 = scmp.eq.s32.totalorder %s15, 1
    %p104 = por %p102, %p103
    %p106 = scmp.ne.s32.totalorder %s89, %s105
    %p107 = scmp.eq.s32.totalorder %s15, 0
    %p108 = por %p106, %p107
    %s109 = ssub.s32 %s17, %s24
    %s110 = ssub.s32 %s16, %s28
    %s111 = sor.u32 %s109, %s110
    %p112 = scmp.eq.s32.totalorder %s111, 0
    %s114 = sadd.s32 %s113, 1
    %s115 = scalar_select %p112, %s113, %s114
    %p118 = pneg %p112
    %p119 = scmp.eq.s32.totalorder %s9, 1
    %p120 = por %p118, %p119
    %p121 = scmp.ne.s32.totalorder %s113, %s116
    %p122 = scmp.eq.s32.totalorder %s9, 0
    %p123 = por %p121, %p122
    %p124 = scmp.ne.s32.totalorder %s113, %s116
    %p125 = scmp.eq.s32.totalorder %s14, 1
    %p126 = por %p124, %p125
    %p127 = scmp.ne.s32.totalorder %s116, %s117
    %p128 = scmp.eq.s32.totalorder %s14, 0
    %p129 = por %p127, %p128
    %p130 = scmp.ne.s32.totalorder %s116, %s117
    %p131 = scmp.eq.s32.totalorder %s15, 1
    %p132 = por %p130, %p131
    %p134 = scmp.ne.s32.totalorder %s117, %s133
    %p135 = scmp.eq.s32.totalorder %s15, 0
    %p136 = por %p134, %p135
    %p137 = scmp.le.s32.totalorder 1, %s9
    %p138 = scmp.lt.s32.totalorder %s9, 3
    %p139 = pnand %p137, %p138
    %p140 = pneg %p139
    // Predicated region
    $region9: #{unet_block_forward.5} parent=5 // pred_check
      _
    $region10: #{unet_block_forward.5} parent=5 // pred_check_branch
      %142 = sbr.rel (%p139) target = $region12
    $region11: #{unet_block_forward.5} parent=5 // pred_region
      %s143 = ssub.s32 %s9, 1
      // Predicated region
      $region13: #{unet_block_forward.5} parent=11 // pred_check
        %p144 = pneg %p75
      $region14: #{unet_block_forward.5} parent=11 // pred_check_branch
        %146 = sbr.rel (%p144) target = $region16
      $region15: #{unet_block_forward.5} parent=11 // pred_region
        %p147 = scmp.lt.s32.totalorder %s18, 0
        %s148 = scalar_select %p147, %s18, 0
        %s149 = scalar_lea.vmem %s1, %s148
      $region16: #{unet_block_forward.5} parent=11 // pred_fallthru
        _
      // Predicated region
      $region17: #{unet_block_forward.5} parent=11 // pred_check
        %p150 = pneg %p101
      $region18: #{unet_block_forward.5} parent=11 // pred_check_branch
        %152 = sbr.rel (%p150) target = $region20
      $region19: #{unet_block_forward.5} parent=11 // pred_region
        %p153 = scmp.lt.s32.totalorder %s18, 0
        %s154 = scalar_select %p153, %s18, 0
        %s155 = scalar_lea.vmem %s2, %s154
      $region20: #{unet_block_forward.5} parent=11 // pred_fallthru
        _
    $region12: #{unet_block_forward.5} parent=5 // pred_fallthru
      _
    %p156 = scmp.lt.s32.totalorder %s9, 2
    // Predicated region
    $region21: #{unet_block_forward.5} parent=5 // pred_check
      %p157 = pneg %p156
    $region22: #{unet_block_forward.5} parent=5 // pred_check_branch
      %159 = sbr.rel (%p157) target = $region24
    $region23: #{unet_block_forward.5} parent=5 // pred_region
      // Predicated region
      $region25: #{unet_block_forward.5} parent=23 // pred_check
        %p160 = pneg %p43
      $region26: #{unet_block_forward.5} parent=23 // pred_check_branch
        %162 = sbr.rel (%p160) target = $region28
      $region27: #{unet_block_forward.5} parent=23 // pred_region
        %s163 = smul.u32 32, %s17
        %p164 = scmp.lt.s32.totalorder %s163, 63
        %s165 = scalar_select %p164, %s163, 63
        %p166 = scmp.lt.s32.totalorder %s16, 0
        %s167 = scalar_select %p166, %s16, 0
        %s168 = sadd.s32 %s167, %s165
        %s169 = smul.addr %s168, 8
        %s170 = scalar_lea.vmem %s0, %s169
        %s171 = smul.u32 32, %s17
      $region28: #{unet_block_forward.5} parent=23 // pred_fallthru
        _
    $region24: #{unet_block_forward.5} parent=5 // pred_fallthru
      _
    %p172 = scmp.le.s32.totalorder 1, %s9
    %p173 = scmp.lt.s32.totalorder %s9, 3
    %p174 = pnand %p172, %p173
    %p175 = pneg %p174
    // Predicated region
    $region29: #{unet_block_forward.5} parent=5 // pred_check
      _
    $region30: #{unet_block_forward.5} parent=5 // pred_check_branch
      %177 = sbr.rel (%p174) target = $region32
    $region31: #{unet_block_forward.5} parent=5 // pred_region
      %s178 = ssub.s32 %s9, 1
      %s179 = smul.u32 32, %s19
      %p180 = scmp.lt.s32.totalorder %s179, 63
      %s181 = scalar_select %p180, %s179, 63
      %p182 = scmp.lt.s32.totalorder %s18, 0
      %s183 = scalar_select %p182, %s18, 0
      %s184 = sadd.s32 %s183, %s181
      %s185 = smul.addr %s184, 8
      %s186 = scalar_lea.vmem %s0, %s185
      %p187 = pneg %p49
      %p188 = pneg %p46
      %p189 = scmp.lt.s32.totalorder %s18, 0
      %s190 = scalar_select %p189, %s18, 0
      %s191 = scalar_lea.vmem %s1, %s190
      %p192 = pneg %p75
      %p193 = pneg %p72
      %p194 = scmp.lt.s32.totalorder %s18, 0
      %s195 = scalar_select %p194, %s18, 0
      %s196 = scalar_lea.vmem %s2, %s195
      %p197 = pneg %p101
      %p198 = pneg %p98
      %p199 = pneg %p129
      %p200 = pneg %p126
      %s201 = smul.u32 32, %s19
      %p202 = scmp.lt.s32.totalorder %s201, 63
      %s203 = scalar_select %p202, %s201, 63
      %p204 = scmp.lt.s32.totalorder %s18, 0
      %s205 = scalar_select %p204, %s18, 0
      %s206 = sadd.s32 %s205, %s203
      %s207 = smul.addr %s206, 4
      %s208 = scalar_lea.vmem %s3, %s207
      %s209 = smul.u32 32, %s19
      %p210 = scmp.lt.s32.totalorder %s209, 63
      %s211 = scalar_select %p210, %s209, 63
      %p212 = scmp.lt.s32.totalorder %s18, 0
      %s213 = scalar_select %p212, %s18, 0
      %s214 = sadd.s32 %s213, %s211
      %s215 = smul.addr %s214, 8
      %s216 = scalar_lea.vmem %s0, %s215
      %s217 = smul.u32 32, %s19
      %p218 = scmp.lt.s32.totalorder %s18, 0
      %s219 = scalar_select %p218, %s18, 0
      %s220 = scalar_lea.vmem %s1, %s219
      %p221 = scmp.lt.s32.totalorder %s18, 0
      %s222 = scalar_select %p221, %s18, 0
      %s223 = scalar_lea.vmem %s2, %s222
      %s224 = smul.u32 32, %s19
      %p225 = scmp.lt.s32.totalorder %s224, 63
      %s226 = scalar_select %p225, %s224, 63
      %p227 = scmp.lt.s32.totalorder %s18, 0
      %s228 = scalar_select %p227, %s18, 0
      %s229 = sadd.s32 %s228, %s226
      %s230 = smul.addr %s229, 4
      %s231 = scalar_lea.vmem %s3, %s230
      %s232 = smul.u32 32, %s19
      %v233 = vld [vmem:[%s216] sm:$0xff]
      %v234 = vld [vmem:[%s216 + $0x8] sm:$0xff]
      %v235 = vld [vmem:[%s216 + $0x10] sm:$0xff]
      %v236 = vld [vmem:[%s216 + $0x18] sm:$0xff]
      %v237 = vld [vmem:[%s216 + $0x20] sm:$0xff]
      %v238 = vld [vmem:[%s216 + $0x28] sm:$0xff]
      %v239 = vld [vmem:[%s216 + $0x30] sm:$0xff]
      %v240 = vld [vmem:[%s216 + $0x38] sm:$0xff]
      %v241 = vld [vmem:[%s216 + $0x40] sm:$0xff]
      %v242 = vld [vmem:[%s216 + $0x48] sm:$0xff]
      %v243 = vld [vmem:[%s216 + $0x50] sm:$0xff]
      %v244 = vld [vmem:[%s216 + $0x58] sm:$0xff]
      %v245 = vld [vmem:[%s216 + $0x60] sm:$0xff]
      %v246 = vld [vmem:[%s216 + $0x68] sm:$0xff]
      %v247 = vld [vmem:[%s216 + $0x70] sm:$0xff]
      %v248 = vld [vmem:[%s216 + $0x78] sm:$0xff]
      %v249 = vld [vmem:[%s216 + $0x80] sm:$0xff]
      %v250 = vld [vmem:[%s216 + $0x88] sm:$0xff]
      %v251 = vld [vmem:[%s216 + $0x90] sm:$0xff]
      %v252 = vld [vmem:[%s216 + $0x98] sm:$0xff]
      %v253 = vld [vmem:[%s216 + $0xa0] sm:$0xff]
      %v254 = vld [vmem:[%s216 + $0xa8] sm:$0xff]
      %v255 = vld [vmem:[%s216 + $0xb0] sm:$0xff]
      %v256 = vld [vmem:[%s216 + $0xb8] sm:$0xff]
      %v257 = vld [vmem:[%s216 + $0xc0] sm:$0xff]
      %v258 = vld [vmem:[%s216 + $0xc8] sm:$0xff]
      %v259 = vld [vmem:[%s216 + $0xd0] sm:$0xff]
      %v260 = vld [vmem:[%s216 + $0xd8] sm:$0xff]
      %v261 = vld [vmem:[%s216 + $0xe0] sm:$0xff]
      %v262 = vld [vmem:[%s216 + $0xe8] sm:$0xff]
      %v263 = vld [vmem:[%s216 + $0xf0] sm:$0xff]
      %v264 = vld [vmem:[%s216 + $0xf8] sm:$0xff]
      %v265 = vld [vmem:[%s220] sm:$0x1]
      %v267 = vlaneseq
      %v268 = vshrl.u32 %v267, 7
      %v269 = vsub.s32 0, %v268
      %v270 = vrot.slane %v265, %v269
      %v272 = vmul.f32 %v233, %v270
      %v273 = vmul.f32 %v234, %v270
      %v274 = vmul.f32 %v235, %v270
      %v275 = vmul.f32 %v236, %v270
      %v276 = vmul.f32 %v237, %v270
      %v277 = vmul.f32 %v238, %v270
      %v278 = vmul.f32 %v239, %v270
      %v279 = vmul.f32 %v240, %v270
      %v280 = vmul.f32 %v241, %v270
      %v281 = vmul.f32 %v242, %v270
      %v282 = vmul.f32 %v243, %v270
      %v283 = vmul.f32 %v244, %v270
      %v284 = vmul.f32 %v245, %v270
      %v285 = vmul.f32 %v246, %v270
      %v286 = vmul.f32 %v247, %v270
      %v287 = vmul.f32 %v248, %v270
      %v288 = vmul.f32 %v249, %v270
      %v289 = vmul.f32 %v250, %v270
      %v290 = vmul.f32 %v251, %v270
      %v291 = vmul.f32 %v252, %v270
      %v292 = vmul.f32 %v253, %v270
      %v293 = vmul.f32 %v254, %v270
      %v294 = vmul.f32 %v255, %v270
      %v295 = vmul.f32 %v256, %v270
      %v296 = vmul.f32 %v257, %v270
      %v297 = vmul.f32 %v258, %v270
      %v298 = vmul.f32 %v259, %v270
      %v299 = vmul.f32 %v260, %v270
      %v300 = vmul.f32 %v261, %v270
      %v301 = vmul.f32 %v262, %v270
      %v302 = vmul.f32 %v263, %v270
      %v303 = vmul.f32 %v264, %v270
      %v304 = vld [vmem:[%s223] sm:$0x1]
      %v306 = vlaneseq
      %v307 = vshrl.u32 %v306, 7
      %v308 = vsub.s32 0, %v307
      %v309 = vrot.slane %v304, %v308
      %v311 = vadd.f32 %v272, %v309
      %v312 = vadd.f32 %v273, %v309
      %v313 = vadd.f32 %v274, %v309
      %v314 = vadd.f32 %v275, %v309
      %v315 = vadd.f32 %v276, %v309
      %v316 = vadd.f32 %v277, %v309
      %v317 = vadd.f32 %v278, %v309
      %v318 = vadd.f32 %v279, %v309
      %v319 = vadd.f32 %v280, %v309
      %v320 = vadd.f32 %v281, %v309
      %v321 = vadd.f32 %v282, %v309
      %v322 = vadd.f32 %v283, %v309
      %v323 = vadd.f32 %v284, %v309
      %v324 = vadd.f32 %v285, %v309
      %v325 = vadd.f32 %v286, %v309
      %v326 = vadd.f32 %v287, %v309
      %v327 = vadd.f32 %v288, %v309
      %v328 = vadd.f32 %v289, %v309
      %v329 = vadd.f32 %v290, %v309
      %v330 = vadd.f32 %v291, %v309
      %v331 = vadd.f32 %v292, %v309
      %v332 = vadd.f32 %v293, %v309
      %v333 = vadd.f32 %v294, %v309
      %v334 = vadd.f32 %v295, %v309
      %v335 = vadd.f32 %v296, %v309
      %v336 = vadd.f32 %v297, %v309
      %v337 = vadd.f32 %v298, %v309
      %v338 = vadd.f32 %v299, %v309
      %v339 = vadd.f32 %v300, %v309
      %v340 = vadd.f32 %v301, %v309
      %v341 = vadd.f32 %v302, %v309
      %v342 = vadd.f32 %v303, %v309
      %v343 = vmax.f32 %v311, 0.0
      %v344 = vmax.f32 %v312, 0.0
      %v345 = vmax.f32 %v313, 0.0
      %v346 = vmax.f32 %v314, 0.0
      %v347 = vmax.f32 %v315, 0.0
      %v348 = vmax.f32 %v316, 0.0
      %v349 = vmax.f32 %v317, 0.0
      %v350 = vmax.f32 %v318, 0.0
      %v351 = vmax.f32 %v319, 0.0
      %v352 = vmax.f32 %v320, 0.0
      %v353 = vmax.f32 %v321, 0.0
      %v354 = vmax.f32 %v322, 0.0
      %v355 = vmax.f32 %v323, 0.0
      %v356 = vmax.f32 %v324, 0.0
      %v357 = vmax.f32 %v325, 0.0
      %v358 = vmax.f32 %v326, 0.0
      %v359 = vmax.f32 %v327, 0.0
      %v360 = vmax.f32 %v328, 0.0
      %v361 = vmax.f32 %v329, 0.0
      %v362 = vmax.f32 %v330, 0.0
      %v363 = vmax.f32 %v331, 0.0
      %v364 = vmax.f32 %v332, 0.0
      %v365 = vmax.f32 %v333, 0.0
      %v366 = vmax.f32 %v334, 0.0
      %v367 = vmax.f32 %v335, 0.0
      %v368 = vmax.f32 %v336, 0.0
      %v369 = vmax.f32 %v337, 0.0
      %v370 = vmax.f32 %v338, 0.0
      %v371 = vmax.f32 %v339, 0.0
      %v372 = vmax.f32 %v340, 0.0
      %v373 = vmax.f32 %v341, 0.0
      %v374 = vmax.f32 %v342, 0.0
      %v375 = vpack.c.bf16 %v344, %v343
      %v376 = vpack.c.bf16 %v346, %v345
      %v377 = vpack.c.bf16 %v348, %v347
      %v378 = vpack.c.bf16 %v350, %v349
      %v379 = vpack.c.bf16 %v352, %v351
      %v380 = vpack.c.bf16 %v354, %v353
      %v381 = vpack.c.bf16 %v356, %v355
      %v382 = vpack.c.bf16 %v358, %v357
      %v383 = vpack.c.bf16 %v360, %v359
      %v384 = vpack.c.bf16 %v362, %v361
      %v385 = vpack.c.bf16 %v364, %v363
      %v386 = vpack.c.bf16 %v366, %v365
      %v387 = vpack.c.bf16 %v368, %v367
      %v388 = vpack.c.bf16 %v370, %v369
      %v389 = vpack.c.bf16 %v372, %v371
      %v390 = vpack.c.bf16 %v374, %v373
      %v407 = vunpack.c.l.b16 %v375
      %v408 = vunpack.c.h.b16 %v375
      %v409 = vunpack.c.l.b16 %v376
      %v410 = vunpack.c.h.b16 %v376
      %v411 = vunpack.c.l.b16 %v377
      %v412 = vunpack.c.h.b16 %v377
      %v413 = vunpack.c.l.b16 %v378
      %v414 = vunpack.c.h.b16 %v378
      %v415 = vunpack.c.l.b16 %v379
      %v416 = vunpack.c.h.b16 %v379
      %v417 = vunpack.c.l.b16 %v380
      %v418 = vunpack.c.h.b16 %v380
      %v419 = vunpack.c.l.b16 %v381
      %v420 = vunpack.c.h.b16 %v381
      %v421 = vunpack.c.l.b16 %v382
      %v422 = vunpack.c.h.b16 %v382
      %v423 = vunpack.c.l.b16 %v383
      %v424 = vunpack.c.h.b16 %v383
      %v425 = vunpack.c.l.b16 %v384
      %v426 = vunpack.c.h.b16 %v384
      %v427 = vunpack.c.l.b16 %v385
      %v428 = vunpack.c.h.b16 %v385
      %v429 = vunpack.c.l.b16 %v386
      %v430 = vunpack.c.h.b16 %v386
      %v431 = vunpack.c.l.b16 %v387
      %v432 = vunpack.c.h.b16 %v387
      %v433 = vunpack.c.l.b16 %v388
      %v434 = vunpack.c.h.b16 %v388
      %v435 = vunpack.c.l.b16 %v389
      %v436 = vunpack.c.h.b16 %v389
      %v437 = vunpack.c.l.b16 %v390
      %v438 = vunpack.c.h.b16 %v390
      %v439 = vpack.c.b16 %v407, %v407
      %v440 = vpack.c.b16 %v408, %v408
      %v441 = vpack.c.b16 %v409, %v409
      %v442 = vpack.c.b16 %v410, %v410
      %v443 = vpack.c.b16 %v411, %v411
      %v444 = vpack.c.b16 %v412, %v412
      %v445 = vpack.c.b16 %v413, %v413
      %v446 = vpack.c.b16 %v414, %v414
      %v447 = vpack.c.b16 %v415, %v415
      %v448 = vpack.c.b16 %v416, %v416
      %v449 = vpack.c.b16 %v417, %v417
      %v450 = vpack.c.b16 %v418, %v418
      %v451 = vpack.c.b16 %v419, %v419
      %v452 = vpack.c.b16 %v420, %v420
      %v453 = vpack.c.b16 %v421, %v421
      %v454 = vpack.c.b16 %v422, %v422
      %v455 = vpack.c.b16 %v423, %v423
      %v456 = vpack.c.b16 %v424, %v424
      %v457 = vpack.c.b16 %v425, %v425
      %v458 = vpack.c.b16 %v426, %v426
      %v459 = vpack.c.b16 %v427, %v427
      %v460 = vpack.c.b16 %v428, %v428
      %v461 = vpack.c.b16 %v429, %v429
      %v462 = vpack.c.b16 %v430, %v430
      %v463 = vpack.c.b16 %v431, %v431
      %v464 = vpack.c.b16 %v432, %v432
      %v465 = vpack.c.b16 %v433, %v433
      %v466 = vpack.c.b16 %v434, %v434
      %v467 = vpack.c.b16 %v435, %v435
      %v468 = vpack.c.b16 %v436, %v436
      %v469 = vpack.c.b16 %v437, %v437
      %v470 = vpack.c.b16 %v438, %v438
      %503 = vst [vmem:[%s231] sm:$0xf] %v439
      %504 = vst [vmem:[%s231 + $0x4] sm:$0xf] %v440
      %505 = vst [vmem:[%s231 + $0x8] sm:$0xf] %v441
      %506 = vst [vmem:[%s231 + $0xc] sm:$0xf] %v442
      %507 = vst [vmem:[%s231 + $0x10] sm:$0xf] %v443
      %508 = vst [vmem:[%s231 + $0x14] sm:$0xf] %v444
      %509 = vst [vmem:[%s231 + $0x18] sm:$0xf] %v445
      %510 = vst [vmem:[%s231 + $0x1c] sm:$0xf] %v446
      %511 = vst [vmem:[%s231 + $0x20] sm:$0xf] %v447
      %512 = vst [vmem:[%s231 + $0x24] sm:$0xf] %v448
      %513 = vst [vmem:[%s231 + $0x28] sm:$0xf] %v449
      %514 = vst [vmem:[%s231 + $0x2c] sm:$0xf] %v450
      %515 = vst [vmem:[%s231 + $0x30] sm:$0xf] %v451
      %516 = vst [vmem:[%s231 + $0x34] sm:$0xf] %v452
      %517 = vst [vmem:[%s231 + $0x38] sm:$0xf] %v453
      %518 = vst [vmem:[%s231 + $0x3c] sm:$0xf] %v454
      %519 = vst [vmem:[%s231 + $0x40] sm:$0xf] %v455
      %520 = vst [vmem:[%s231 + $0x44] sm:$0xf] %v456
      %521 = vst [vmem:[%s231 + $0x48] sm:$0xf] %v457
      %522 = vst [vmem:[%s231 + $0x4c] sm:$0xf] %v458
      %523 = vst [vmem:[%s231 + $0x50] sm:$0xf] %v459
      %524 = vst [vmem:[%s231 + $0x54] sm:$0xf] %v460
      %525 = vst [vmem:[%s231 + $0x58] sm:$0xf] %v461
      %526 = vst [vmem:[%s231 + $0x5c] sm:$0xf] %v462
      %527 = vst [vmem:[%s231 + $0x60] sm:$0xf] %v463
      %528 = vst [vmem:[%s231 + $0x64] sm:$0xf] %v464
      %529 = vst [vmem:[%s231 + $0x68] sm:$0xf] %v465
      %530 = vst [vmem:[%s231 + $0x6c] sm:$0xf] %v466
      %531 = vst [vmem:[%s231 + $0x70] sm:$0xf] %v467
      %532 = vst [vmem:[%s231 + $0x74] sm:$0xf] %v468
      %533 = vst [vmem:[%s231 + $0x78] sm:$0xf] %v469
      %534 = vst [vmem:[%s231 + $0x7c] sm:$0xf] %v470
      %s535 = smul.u32 32, %s19
      %p536 = scmp.lt.s32.totalorder %s535, 63
      %s537 = scalar_select %p536, %s535, 63
      %p538 = scmp.lt.s32.totalorder %s18, 0
      %s539 = scalar_select %p538, %s18, 0
      %s540 = sadd.s32 %s539, %s537
      %s541 = smul.addr %s540, 4
      %s542 = scalar_lea.vmem %s3, %s541
      // Predicated region
      $region33: #{unet_block_forward.5} parent=31 // pred_check
        %p543 = pneg %p126
      $region34: #{unet_block_forward.5} parent=31 // pred_check_branch
        %545 = sbr.rel (%p543) target = $region36
      $region35: #{unet_block_forward.5} parent=31 // pred_region
        %s546 = smul.u32 32, %s19
      $region36: #{unet_block_forward.5} parent=31 // pred_fallthru
        _
    $region32: #{unet_block_forward.5} parent=5 // pred_fallthru
      _
    %p547 = scmp.le.s32.totalorder 2, %s9
    // Predicated region
    $region37: #{unet_block_forward.5} parent=5 // pred_check
      %p548 = pneg %p547
    $region38: #{unet_block_forward.5} parent=5 // pred_check_branch
      %550 = sbr.rel (%p548) target = $region40
    $region39: #{unet_block_forward.5} parent=5 // pred_region
      %s551 = ssub.s32 %s9, 2
      // Predicated region
      $region41: #{unet_block_forward.5} parent=39 // pred_check
        %p552 = pneg %p132
      $region42: #{unet_block_forward.5} parent=39 // pred_check_branch
        %554 = sbr.rel (%p552) target = $region44
      $region43: #{unet_block_forward.5} parent=39 // pred_region
        %s555 = smul.u32 32, %s21
        %p556 = scmp.lt.s32.totalorder %s555, 63
        %s557 = scalar_select %p556, %s555, 63
        %p558 = scmp.lt.s32.totalorder %s20, 0
        %s559 = scalar_select %p558, %s20, 0
        %s560 = sadd.s32 %s559, %s557
        %s561 = smul.addr %s560, 4
        %s562 = scalar_lea.vmem %s3, %s561
      $region44: #{unet_block_forward.5} parent=39 // pred_fallthru
        _
    $region40: #{unet_block_forward.5} parent=5 // pred_fallthru
      _
  $region6: #{unet_block_forward.5} parent=0 // loop_footer
    %s13 = sadd.s32 1, %s9
  $region7: #{unet_block_forward.5} parent=0 // loop_footer_branch
    %8 = sbr.rel target = $region3
  $region8: #{unet_block_forward.5} parent=0 // loop_exit
    _

// kernel: unet_block_forward.4
$region0: #{unet_block_forward.4}
  #allocation0 [shape = 'u32[]', space=smem, size = 0x4, offset = 0x4, fixed_abs, tag = 'smem constant byte address 0x4 - core index']
  #allocation1 [shape = 'u32[144,128]{1,0:T(1,128)}', space=vmem, size = 0x12000, scoped, tag = 'internal scratch']
  %s0 = inlined_call_operand.vmem [shape: bf16[512,128], index: 0, kind: input, shape index: {}]
  %s1 = inlined_call_operand.vmem [shape: bf16[128,128], index: 1, kind: input, shape index: {}]
  %s2 = inlined_call_operand.vmem [shape: f32[512,128], index: 2, kind: output, shape index: {0}]
  %s3 = inlined_call_operand.vmem [shape: f32[1,128], index: 3, kind: output, shape index: {1}]
  %s4 = inlined_call_operand.vmem [shape: f32[1,128], index: 4, kind: output, shape index: {2}]
  %5 = xla_tuple %s2, %s3, %s4
  %s6 = sld [smem:[#allocation0]]
  $region61: #{unet_block_forward.4} parent=0
    _
  %s8 = ssub.s32 1, %s6
  %s9 = scalar_select 0, %s8, %s6
  loop: start=0, step=1, limit=4
  $region2: #{unet_block_forward.4} parent=0 // loop_pre_header
    _
  $region3: #{unet_block_forward.4} parent=0 // loop_header
    %s11 = sphi 0, %s15
    %p12 = scmp.ge.s32.totalorder %s11, 4
    %s18 = sphi 0, %s30
    %s19 = sphi 0, %s26
    %s20 = sphi 0, %s18
    %s21 = sphi 0, %s19
    %s22 = sphi 0, %s20
    %s23 = sphi 0, %s21
    %s33 = sphi 0, %s35
    %s36 = sphi 0, %s33
    %s37 = sphi 0, %s36
    %s53 = sphi 0, %s37
    %s59 = sphi 0, %s61
    %s62 = sphi 0, %s59
    %s63 = sphi 0, %s62
    %s79 = sphi 0, %s63
    %s87 = sphi 0, %s89
    %s90 = sphi 0, %s87
    %s91 = sphi 0, %s90
    %s107 = sphi 0, %s91
    %s113 = sphi 0, %s115
    %s116 = sphi 0, %s113
    %s117 = sphi 0, %s116
    %s133 = sphi 0, %s117
    %s139 = sphi 0, %s141
    %s142 = sphi 0, %s139
    %s143 = sphi 0, %s142
    %s159 = sphi 0, %s143
  $region4: #{unet_block_forward.4} parent=0 // loop_header_branch
    %14 = sbr.rel (%p12) target = $region8
  $region5: #{unet_block_forward.4} parent=0 // loop_body
    %s16 = ssub.s32 %s11, 1
    %s17 = ssub.s32 %s11, 2
    %s24 = sadd.s32 1, %s19
    %p25 = scmp.ge.s32.totalorder %s24, 2
    %s26 = scalar_select %p25, 0, %s24
    %s27 = sadd.s32 1, %s18
    %s28 = scalar_select %p25, %s27, %s18
    %p29 = scmp.ge.s32.totalorder %s28, 1
    %s30 = scalar_select %p29, 0, %s28
    %s31 = ssub.s32 %s19, %s26
    %p32 = scmp.eq.s32.totalorder %s31, 0
    %s34 = sadd.s32 %s33, 1
    %s35 = scalar_select %p32, %s33, %s34
    %p38 = pneg %p32
    %p39 = scmp.eq.s32.totalorder %s11, 1
    %p40 = por %p38, %p39
    %p41 = scmp.ne.s32.totalorder %s33, %s36
    %p42 = scmp.eq.s32.totalorder %s11, 0
    %p43 = por %p41, %p42
    %p44 = scmp.ne.s32.totalorder %s33, %s36
    %p45 = scmp.eq.s32.totalorder %s16, 1
    %p46 = por %p44, %p45
    %p47 = scmp.ne.s32.totalorder %s36, %s37
    %p48 = scmp.eq.s32.totalorder %s16, 0
    %p49 = por %p47, %p48
    %p50 = scmp.ne.s32.totalorder %s36, %s37
    %p51 = scmp.eq.s32.totalorder %s17, 1
    %p52 = por %p50, %p51
    %p54 = scmp.ne.s32.totalorder %s37, %s53
    %p55 = scmp.eq.s32.totalorder %s17, 0
    %p56 = por %p54, %p55
    %s57 = ssub.s32 %s18, %s30
    %p58 = scmp.eq.s32.totalorder %s57, 0
    %s60 = sadd.s32 %s59, 1
    %s61 = scalar_select %p58, %s59, %s60
    %p64 = pneg %p58
    %p65 = scmp.eq.s32.totalorder %s11, 1
    %p66 = por %p64, %p65
    %p67 = scmp.ne.s32.totalorder %s59, %s62
    %p68 = scmp.eq.s32.totalorder %s11, 0
    %p69 = por %p67, %p68
    %p70 = scmp.ne.s32.totalorder %s59, %s62
    %p71 = scmp.eq.s32.totalorder %s16, 1
    %p72 = por %p70, %p71
    %p73 = scmp.ne.s32.totalorder %s62, %s63
    %p74 = scmp.eq.s32.totalorder %s16, 0
    %p75 = por %p73, %p74
    %p76 = scmp.ne.s32.totalorder %s62, %s63
    %p77 = scmp.eq.s32.totalorder %s17, 1
    %p78 = por %p76, %p77
    %p80 = scmp.ne.s32.totalorder %s63, %s79
    %p81 = scmp.eq.s32.totalorder %s17, 0
    %p82 = por %p80, %p81
    %s83 = ssub.s32 %s19, %s26
    %s84 = ssub.s32 %s18, %s30
    %s85 = sor.u32 %s83, %s84
    %p86 = scmp.eq.s32.totalorder %s85, 0
    %s88 = sadd.s32 %s87, 1
    %s89 = scalar_select %p86, %s87, %s88
    %p92 = pneg %p86
    %p93 = scmp.eq.s32.totalorder %s11, 1
    %p94 = por %p92, %p93
    %p95 = scmp.ne.s32.totalorder %s87, %s90
    %p96 = scmp.eq.s32.totalorder %s11, 0
    %p97 = por %p95, %p96
    %p98 = scmp.ne.s32.totalorder %s87, %s90
    %p99 = scmp.eq.s32.totalorder %s16, 1
    %p100 = por %p98, %p99
    %p101 = scmp.ne.s32.totalorder %s90, %s91
    %p102 = scmp.eq.s32.totalorder %s16, 0
    %p103 = por %p101, %p102
    %p104 = scmp.ne.s32.totalorder %s90, %s91
    %p105 = scmp.eq.s32.totalorder %s17, 1
    %p106 = por %p104, %p105
    %p108 = scmp.ne.s32.totalorder %s91, %s107
    %p109 = scmp.eq.s32.totalorder %s17, 0
    %p110 = por %p108, %p109
    %s111 = ssub.s32 %s18, %s30
    %p112 = scmp.eq.s32.totalorder %s111, 0
    %s114 = sadd.s32 %s113, 1
    %s115 = scalar_select %p112, %s113, %s114
    %p118 = pneg %p112
    %p119 = scmp.eq.s32.totalorder %s11, 1
    %p120 = por %p118, %p119
    %p121 = scmp.ne.s32.totalorder %s113, %s116
    %p122 = scmp.eq.s32.totalorder %s11, 0
    %p123 = por %p121, %p122
    %p124 = scmp.ne.s32.totalorder %s113, %s116
    %p125 = scmp.eq.s32.totalorder %s16, 1
    %p126 = por %p124, %p125
    %p127 = scmp.ne.s32.totalorder %s116, %s117
    %p128 = scmp.eq.s32.totalorder %s16, 0
    %p129 = por %p127, %p128
    %p130 = scmp.ne.s32.totalorder %s116, %s117
    %p131 = scmp.eq.s32.totalorder %s17, 1
    %p132 = por %p130, %p131
    %p134 = scmp.ne.s32.totalorder %s117, %s133
    %p135 = scmp.eq.s32.totalorder %s17, 0
    %p136 = por %p134, %p135
    %s137 = ssub.s32 %s18, %s30
    %p138 = scmp.eq.s32.totalorder %s137, 0
    %s140 = sadd.s32 %s139, 1
    %s141 = scalar_select %p138, %s139, %s140
    %p144 = pneg %p138
    %p145 = scmp.eq.s32.totalorder %s11, 1
    %p146 = por %p144, %p145
    %p147 = scmp.ne.s32.totalorder %s139, %s142
    %p148 = scmp.eq.s32.totalorder %s11, 0
    %p149 = por %p147, %p148
    %p150 = scmp.ne.s32.totalorder %s139, %s142
    %p151 = scmp.eq.s32.totalorder %s16, 1
    %p152 = por %p150, %p151
    %p153 = scmp.ne.s32.totalorder %s142, %s143
    %p154 = scmp.eq.s32.totalorder %s16, 0
    %p155 = por %p153, %p154
    %p156 = scmp.ne.s32.totalorder %s142, %s143
    %p157 = scmp.eq.s32.totalorder %s17, 1
    %p158 = por %p156, %p157
    %p160 = scmp.ne.s32.totalorder %s143, %s159
    %p161 = scmp.eq.s32.totalorder %s17, 0
    %p162 = por %p160, %p161
    %p163 = scmp.le.s32.totalorder 1, %s11
    %p164 = scmp.lt.s32.totalorder %s11, 3
    %p165 = pnand %p163, %p164
    %p166 = pneg %p165
    // Predicated region
    $region9: #{unet_block_forward.4} parent=5 // pred_check
      _
    $region10: #{unet_block_forward.4} parent=5 // pred_check_branch
      %168 = sbr.rel (%p165) target = $region12
    $region11: #{unet_block_forward.4} parent=5 // pred_region
      %s169 = ssub.s32 %s11, 1
      // Predicated region
      $region13: #{unet_block_forward.4} parent=11 // pred_check
        %p170 = pneg %p75
      $region14: #{unet_block_forward.4} parent=11 // pred_check_branch
        %172 = sbr.rel (%p170) target = $region16
      $region15: #{unet_block_forward.4} parent=11 // pred_region
        %p173 = scmp.lt.s32.totalorder %s20, 0
        %s174 = scalar_select %p173, %s20, 0
        %s175 = smul.addr %s174, 4
        %s176 = scalar_lea.vmem %s1, %s175
      $region16: #{unet_block_forward.4} parent=11 // pred_fallthru
        _
    $region12: #{unet_block_forward.4} parent=5 // pred_fallthru
      _
    %p177 = scmp.lt.s32.totalorder %s11, 2
    // Predicated region
    $region17: #{unet_block_forward.4} parent=5 // pred_check
      %p178 = pneg %p177
    $region18: #{unet_block_forward.4} parent=5 // pred_check_branch
      %180 = sbr.rel (%p178) target = $region20
    $region19: #{unet_block_forward.4} parent=5 // pred_region
      // Predicated region
      $region21: #{unet_block_forward.4} parent=19 // pred_check
        %p181 = pneg %p43
      $region22: #{unet_block_forward.4} parent=19 // pred_check_branch
        %183 = sbr.rel (%p181) target = $region24
      $region23: #{unet_block_forward.4} parent=19 // pred_region
        %s184 = smul.u32 32, %s19
        %p185 = scmp.lt.s32.totalorder %s184, 63
        %s186 = scalar_select %p185, %s184, 63
        %s187 = smul.addr %s186, 4
        %s188 = scalar_lea.vmem %s0, %s187
        %s189 = smul.u32 32, %s19
      $region24: #{unet_block_forward.4} parent=19 // pred_fallthru
        _
    $region20: #{unet_block_forward.4} parent=5 // pred_fallthru
      _
    %p190 = scmp.le.s32.totalorder 1, %s11
    %p191 = scmp.lt.s32.totalorder %s11, 3
    %p192 = pnand %p190, %p191
    %p193 = pneg %p192
    // Predicated region
    $region25: #{unet_block_forward.4} parent=5 // pred_check
      _
    $region26: #{unet_block_forward.4} parent=5 // pred_check_branch
      %195 = sbr.rel (%p192) target = $region28
    $region27: #{unet_block_forward.4} parent=5 // pred_region
      %s196 = ssub.s32 %s11, 1
      %s197 = smul.u32 32, %s21
      %p198 = scmp.lt.s32.totalorder %s197, 63
      %s199 = scalar_select %p198, %s197, 63
      %s200 = smul.addr %s199, 4
      %s201 = scalar_lea.vmem %s0, %s200
      %p202 = pneg %p49
      %p203 = pneg %p46
      %p204 = scmp.lt.s32.totalorder %s20, 0
      %s205 = scalar_select %p204, %s20, 0
      %s206 = smul.addr %s205, 4
      %s207 = scalar_lea.vmem %s1, %s206
      %p208 = pneg %p75
      %p209 = pneg %p72
      %p210 = pneg %p103
      %p211 = pneg %p100
      %s212 = smul.u32 32, %s21
      %p213 = scmp.lt.s32.totalorder %s212, 63
      %s214 = scalar_select %p213, %s212, 63
      %p215 = scmp.lt.s32.totalorder %s20, 0
      %s216 = scalar_select %p215, %s20, 0
      %s217 = sadd.s32 %s216, %s214
      %s218 = smul.addr %s217, 8
      %s219 = scalar_lea.vmem %s2, %s218
      %p220 = pneg %p129
      %p221 = pneg %p126
      %p222 = scmp.lt.s32.totalorder %s20, 0
      %s223 = scalar_select %p222, %s20, 0
      %s224 = scalar_lea.vmem %s3, %s223
      %p225 = pneg %p155
      %p226 = pneg %p152
      %p227 = scmp.lt.s32.totalorder %s20, 0
      %s228 = scalar_select %p227, %s20, 0
      %s229 = scalar_lea.vmem %s4, %s228
      %s230 = smul.u32 32, %s21
      %p231 = scmp.lt.s32.totalorder %s230, 63
      %s232 = scalar_select %p231, %s230, 63
      %s233 = smul.addr %s232, 4
      %s234 = scalar_lea.vmem %s0, %s233
      %s235 = smul.u32 32, %s21
      %p236 = scmp.lt.s32.totalorder %s20, 0
      %s237 = scalar_select %p236, %s20, 0
      %s238 = smul.addr %s237, 4
      %s239 = scalar_lea.vmem %s1, %s238
      %s240 = smul.u32 32, %s21
      %p241 = scmp.lt.s32.totalorder %s240, 63
      %s242 = scalar_select %p241, %s240, 63
      %p243 = scmp.lt.s32.totalorder %s20, 0
      %s244 = scalar_select %p243, %s20, 0
      %s245 = sadd.s32 %s244, %s242
      %s246 = smul.addr %s245, 8
      %s247 = scalar_lea.vmem %s2, %s246
      %s248 = smul.u32 32, %s21
      %p249 = scmp.lt.s32.totalorder %s20, 0
      %s250 = scalar_select %p249, %s20, 0
      %s251 = scalar_lea.vmem %s3, %s250
      %p252 = scmp.lt.s32.totalorder %s20, 0
      %s253 = scalar_select %p252, %s20, 0
      %s254 = scalar_lea.vmem %s4, %s253
      %p256 = scmp.eq.s32.totalorder %s21, 0
      // Predicated region
      $region29: #{unet_block_forward.4} parent=27 // pred_check
        %p257 = pneg %p256
      $region30: #{unet_block_forward.4} parent=27 // pred_check_branch
        %259 = sbr.rel (%p257) target = $region32
      $region31: #{unet_block_forward.4} parent=27 // pred_region
        %260 = vst [vmem:[%s251] sm:$0x1] 0.0
        %261 = vst [vmem:[%s254] sm:$0x1] 0.0
      $region32: #{unet_block_forward.4} parent=27 // pred_fallthru
        _
      %v262 = vld [vmem:[%s234] sm:$0xf]
      %v263 = vld [vmem:[%s234 + $0x4] sm:$0xf]
      %v264 = vld [vmem:[%s234 + $0x8] sm:$0xf]
      %v265 = vld [vmem:[%s234 + $0xc] sm:$0xf]
      %v266 = vld [vmem:[%s234 + $0x10] sm:$0xf]
      %v267 = vld [vmem:[%s234 + $0x14] sm:$0xf]
      %v268 = vld [vmem:[%s234 + $0x18] sm:$0xf]
      %v269 = vld [vmem:[%s234 + $0x1c] sm:$0xf]
      %v270 = vld [vmem:[%s234 + $0x20] sm:$0xf]
      %v271 = vld [vmem:[%s234 + $0x24] sm:$0xf]
      %v272 = vld [vmem:[%s234 + $0x28] sm:$0xf]
      %v273 = vld [vmem:[%s234 + $0x2c] sm:$0xf]
      %v274 = vld [vmem:[%s234 + $0x30] sm:$0xf]
      %v275 = vld [vmem:[%s234 + $0x34] sm:$0xf]
      %v276 = vld [vmem:[%s234 + $0x38] sm:$0xf]
      %v277 = vld [vmem:[%s234 + $0x3c] sm:$0xf]
      %v278 = vld [vmem:[%s234 + $0x40] sm:$0xf]
      %v279 = vld [vmem:[%s234 + $0x44] sm:$0xf]
      %v280 = vld [vmem:[%s234 + $0x48] sm:$0xf]
      %v281 = vld [vmem:[%s234 + $0x4c] sm:$0xf]
      %v282 = vld [vmem:[%s234 + $0x50] sm:$0xf]
      %v283 = vld [vmem:[%s234 + $0x54] sm:$0xf]
      %v284 = vld [vmem:[%s234 + $0x58] sm:$0xf]
      %v285 = vld [vmem:[%s234 + $0x5c] sm:$0xf]
      %v286 = vld [vmem:[%s234 + $0x60] sm:$0xf]
      %v287 = vld [vmem:[%s234 + $0x64] sm:$0xf]
      %v288 = vld [vmem:[%s234 + $0x68] sm:$0xf]
      %v289 = vld [vmem:[%s234 + $0x6c] sm:$0xf]
      %v290 = vld [vmem:[%s234 + $0x70] sm:$0xf]
      %v291 = vld [vmem:[%s234 + $0x74] sm:$0xf]
      %v292 = vld [vmem:[%s234 + $0x78] sm:$0xf]
      %v293 = vld [vmem:[%s234 + $0x7c] sm:$0xf]
      %v294 = vld [vmem:[%s239] sm:$0xf]
      %v295 = vld [vmem:[%s239 + $0x4] sm:$0xf]
      %v296 = vld [vmem:[%s239 + $0x8] sm:$0xf]
      %v297 = vld [vmem:[%s239 + $0xc] sm:$0xf]
      %v298 = vld [vmem:[%s239 + $0x10] sm:$0xf]
      %v299 = vld [vmem:[%s239 + $0x14] sm:$0xf]
      %v300 = vld [vmem:[%s239 + $0x18] sm:$0xf]
      %v301 = vld [vmem:[%s239 + $0x1c] sm:$0xf]
      %v302 = vld [vmem:[%s239 + $0x20] sm:$0xf]
      %v303 = vld [vmem:[%s239 + $0x24] sm:$0xf]
      %v304 = vld [vmem:[%s239 + $0x28] sm:$0xf]
      %v305 = vld [vmem:[%s239 + $0x2c] sm:$0xf]
      %v306 = vld [vmem:[%s239 + $0x30] sm:$0xf]
      %v307 = vld [vmem:[%s239 + $0x34] sm:$0xf]
      %v308 = vld [vmem:[%s239 + $0x38] sm:$0xf]
      %v309 = vld [vmem:[%s239 + $0x3c] sm:$0xf]
      %v342 = vunpack.c.l.b16 %v262
      %v343 = vunpack.c.l.b16 %v263
      %v344 = vunpack.c.l.b16 %v264
      %v345 = vunpack.c.l.b16 %v265
      %v346 = vunpack.c.l.b16 %v266
      %v347 = vunpack.c.l.b16 %v267
      %v348 = vunpack.c.l.b16 %v268
      %v349 = vunpack.c.l.b16 %v269
      %v350 = vunpack.c.l.b16 %v270
      %v351 = vunpack.c.l.b16 %v271
      %v352 = vunpack.c.l.b16 %v272
      %v353 = vunpack.c.l.b16 %v273
      %v354 = vunpack.c.l.b16 %v274
      %v355 = vunpack.c.l.b16 %v275
      %v356 = vunpack.c.l.b16 %v276
      %v357 = vunpack.c.l.b16 %v277
      %v358 = vunpack.c.l.b16 %v278
      %v359 = vunpack.c.l.b16 %v279
      %v360 = vunpack.c.l.b16 %v280
      %v361 = vunpack.c.l.b16 %v281
      %v362 = vunpack.c.l.b16 %v282
      %v363 = vunpack.c.l.b16 %v283
      %v364 = vunpack.c.l.b16 %v284
      %v365 = vunpack.c.l.b16 %v285
      %v366 = vunpack.c.l.b16 %v286
      %v367 = vunpack.c.l.b16 %v287
      %v368 = vunpack.c.l.b16 %v288
      %v369 = vunpack.c.l.b16 %v289
      %v370 = vunpack.c.l.b16 %v290
      %v371 = vunpack.c.l.b16 %v291
      %v372 = vunpack.c.l.b16 %v292
      %v373 = vunpack.c.l.b16 %v293
      %v374 = vpack.c.b16 %v343, %v342
      %v375 = vpack.c.b16 %v345, %v344
      %v376 = vpack.c.b16 %v347, %v346
      %v377 = vpack.c.b16 %v349, %v348
      %v378 = vpack.c.b16 %v351, %v350
      %v379 = vpack.c.b16 %v353, %v352
      %v380 = vpack.c.b16 %v355, %v354
      %v381 = vpack.c.b16 %v357, %v356
      %v382 = vpack.c.b16 %v359, %v358
      %v383 = vpack.c.b16 %v361, %v360
      %v384 = vpack.c.b16 %v363, %v362
      %v385 = vpack.c.b16 %v365, %v364
      %v386 = vpack.c.b16 %v367, %v366
      %v387 = vpack.c.b16 %v369, %v368
      %v388 = vpack.c.b16 %v371, %v370
      %v389 = vpack.c.b16 %v373, %v372
      %v422 = vunpack.c.l.b16 %v294
      %v423 = vunpack.c.l.b16 %v295
      %v424 = vunpack.c.l.b16 %v296
      %v425 = vunpack.c.l.b16 %v297
      %v426 = vunpack.c.l.b16 %v298
      %v427 = vunpack.c.l.b16 %v299
      %v428 = vunpack.c.l.b16 %v300
      %v429 = vunpack.c.l.b16 %v301
      %v430 = vunpack.c.l.b16 %v302
      %v431 = vunpack.c.l.b16 %v303
      %v432 = vunpack.c.l.b16 %v304
      %v433 = vunpack.c.l.b16 %v305
      %v434 = vunpack.c.l.b16 %v306
      %v435 = vunpack.c.l.b16 %v307
      %v436 = vunpack.c.l.b16 %v308
      %v437 = vunpack.c.l.b16 %v309
      %v438 = vpack.c.b16 %v423, %v422
      %v439 = vpack.c.b16 %v425, %v424
      %v440 = vpack.c.b16 %v427, %v426
      %v441 = vpack.c.b16 %v429, %v428
      %v442 = vpack.c.b16 %v431, %v430
      %v443 = vpack.c.b16 %v433, %v432
      %v444 = vpack.c.b16 %v435, %v434
      %v445 = vpack.c.b16 %v437, %v436
      %454 = vmatprep.subr.bf16.mxu0 0
      %455 = vmatpush1.bf16.msra.mxu0 %v445
      %456 = vmatprep.subr.bf16.mxu0 0
      %457 = vmatpush1.bf16.msra.mxu0 %v444
      %458 = vmatprep.subr.bf16.mxu0 0
      %459 = vmatpush1.bf16.msra.mxu0 %v443
      %460 = vmatprep.subr.bf16.mxu0 0
      %461 = vmatpush1.bf16.msra.mxu0 %v442
      %462 = vmatprep.subr.bf16.mxu0 0
      %463 = vmatpush1.bf16.msra.mxu0 %v441
      %464 = vmatprep.subr.bf16.mxu0 0
      %465 = vmatpush1.bf16.msra.mxu0 %v440
      %466 = vmatprep.subr.bf16.mxu0 0
      %467 = vmatpush1.bf16.msra.mxu0 %v439
      %468 = vmatprep.subr.bf16.mxu0 0
      %469 = vmatpush1.bf16.msra.mxu0 %v438
      %470 = vmatprep.subr.bf16.mxu0 0
      %471 = vmatpush2.bf16.msra.mxu0 0
      %472 = vmatprep.subr.bf16.mxu0 0
      %473 = vmatpush2.bf16.msra.mxu0 0
      %474 = vmatprep.subr.bf16.mxu0 0
      %475 = vmatpush2.bf16.msra.mxu0 0
      %476 = vmatprep.subr.bf16.mxu0 0
      %477 = vmatpush2.bf16.msra.mxu0 0
      %478 = vmatprep.subr.bf16.mxu0 0
      %479 = vmatpush2.bf16.msra.mxu0 0
      %480 = vmatprep.subr.bf16.mxu0 0
      %481 = vmatpush2.bf16.msra.mxu0 0
      %482 = vmatprep.subr.bf16.mxu0 0
      %483 = vmatpush2.bf16.msra.mxu0 0
      %484 = vmatprep.subr.bf16.mxu0 0
      %485 = vmatpush2.bf16.msra.mxu0 0
      %486 = vmatprep.mubr.bf16.mxu0 0
      %487 = vmatmul.mubr.bf16.gmra.mxu0 %v374
      %v488 = vpop.f32.mrf.mxu0
      %v489 = vadd.f32 0.0, %v488
      %v490 = vpop.f32.mrf.mxu0
      %v491 = vpop.f32.mrf.mxu0
      %v492 = vadd.f32 0.0, %v491
      %v493 = vpop.f32.mrf.mxu0
      %494 = vmatprep.mubr.bf16.mxu0 0
      %495 = vmatmul.mubr.bf16.gmra.mxu0 %v375
      %v496 = vpop.f32.mrf.mxu0
      %v497 = vadd.f32 0.0, %v496
      %v498 = vpop.f32.mrf.mxu0
      %v499 = vpop.f32.mrf.mxu0
      %v500 = vadd.f32 0.0, %v499
      %v501 = vpop.f32.mrf.mxu0
      %502 = vmatprep.mubr.bf16.mxu0 0
      %503 = vmatmul.mubr.bf16.gmra.mxu0 %v376
      %v504 = vpop.f32.mrf.mxu0
      %v505 = vadd.f32 0.0, %v504
      %v506 = vpop.f32.mrf.mxu0
      %v507 = vpop.f32.mrf.mxu0
      %v508 = vadd.f32 0.0, %v507
      %v509 = vpop.f32.mrf.mxu0
      %510 = vmatprep.mubr.bf16.mxu0 0
      %511 = vmatmul.mubr.bf16.gmra.mxu0 %v377
      %v512 = vpop.f32.mrf.mxu0
      %v513 = vadd.f32 0.0, %v512
      %v514 = vpop.f32.mrf.mxu0
      %v515 = vpop.f32.mrf.mxu0
      %v516 = vadd.f32 0.0, %v515
      %v517 = vpop.f32.mrf.mxu0
      %518 = vmatprep.mubr.bf16.mxu0 0
      %519 = vmatmul.mubr.bf16.gmra.mxu0 %v378
      %v520 = vpop.f32.mrf.mxu0
      %v521 = vadd.f32 0.0, %v520
      %v522 = vpop.f32.mrf.mxu0
      %v523 = vpop.f32.mrf.mxu0
      %v524 = vadd.f32 0.0, %v523
      %v525 = vpop.f32.mrf.mxu0
      %526 = vmatprep.mubr.bf16.mxu0 0
      %527 = vmatmul.mubr.bf16.gmra.mxu0 %v379
      %v528 = vpop.f32.mrf.mxu0
      %v529 = vadd.f32 0.0, %v528
      %v530 = vpop.f32.mrf.mxu0
      %v531 = vpop.f32.mrf.mxu0
      %v532 = vadd.f32 0.0, %v531
      %v533 = vpop.f32.mrf.mxu0
      %534 = vmatprep.mubr.bf16.mxu0 0
      %535 = vmatmul.mubr.bf16.gmra.mxu0 %v380
      %v536 = vpop.f32.mrf.mxu0
      %v537 = vadd.f32 0.0, %v536
      %v538 = vpop.f32.mrf.mxu0
      %v539 = vpop.f32.mrf.mxu0
      %v540 = vadd.f32 0.0, %v539
      %v541 = vpop.f32.mrf.mxu0
      %542 = vmatprep.mubr.bf16.mxu0 0
      %543 = vmatmul.mubr.bf16.gmra.mxu0 %v381
      %v544 = vpop.f32.mrf.mxu0
      %v545 = vadd.f32 0.0, %v544
      %v546 = vpop.f32.mrf.mxu0
      %v547 = vpop.f32.mrf.mxu0
      %v548 = vadd.f32 0.0, %v547
      %v549 = vpop.f32.mrf.mxu0
      %550 = vmatprep.mubr.bf16.mxu0 0
      %551 = vmatmul.mubr.bf16.gmra.mxu0 %v382
      %v552 = vpop.f32.mrf.mxu0
      %v553 = vadd.f32 0.0, %v552
      %v554 = vpop.f32.mrf.mxu0
      %v555 = vpop.f32.mrf.mxu0
      %v556 = vadd.f32 0.0, %v555
      %v557 = vpop.f32.mrf.mxu0
      %558 = vmatprep.mubr.bf16.mxu0 0
      %559 = vmatmul.mubr.bf16.gmra.mxu0 %v383
      %v560 = vpop.f32.mrf.mxu0
      %v561 = vadd.f32 0.0, %v560
      %v562 = vpop.f32.mrf.mxu0
      %v563 = vpop.f32.mrf.mxu0
      %v564 = vadd.f32 0.0, %v563
      %v565 = vpop.f32.mrf.mxu0
      %566 = vmatprep.mubr.bf16.mxu0 0
      %567 = vmatmul.mubr.bf16.gmra.mxu0 %v384
      %v568 = vpop.f32.mrf.mxu0
      %v569 = vadd.f32 0.0, %v568
      %v570 = vpop.f32.mrf.mxu0
      %v571 = vpop.f32.mrf.mxu0
      %v572 = vadd.f32 0.0, %v571
      %v573 = vpop.f32.mrf.mxu0
      %574 = vmatprep.mubr.bf16.mxu0 0
      %575 = vmatmul.mubr.bf16.gmra.mxu0 %v385
      %v576 = vpop.f32.mrf.mxu0
      %v577 = vadd.f32 0.0, %v576
      %v578 = vpop.f32.mrf.mxu0
      %v579 = vpop.f32.mrf.mxu0
      %v580 = vadd.f32 0.0, %v579
      %v581 = vpop.f32.mrf.mxu0
      %582 = vmatprep.mubr.bf16.mxu0 0
      %583 = vmatmul.mubr.bf16.gmra.mxu0 %v386
      %v584 = vpop.f32.mrf.mxu0
      %v585 = vadd.f32 0.0, %v584
      %v586 = vpop.f32.mrf.mxu0
      %v587 = vpop.f32.mrf.mxu0
      %v588 = vadd.f32 0.0, %v587
      %v589 = vpop.f32.mrf.mxu0
      %590 = vmatprep.mubr.bf16.mxu0 0
      %591 = vmatmul.mubr.bf16.gmra.mxu0 %v387
      %v592 = vpop.f32.mrf.mxu0
      %v593 = vadd.f32 0.0, %v592
      %v594 = vpop.f32.mrf.mxu0
      %v595 = vpop.f32.mrf.mxu0
      %v596 = vadd.f32 0.0, %v595
      %v597 = vpop.f32.mrf.mxu0
      %598 = vmatprep.mubr.bf16.mxu0 0
      %599 = vmatmul.mubr.bf16.gmra.mxu0 %v388
      %v600 = vpop.f32.mrf.mxu0
      %v601 = vadd.f32 0.0, %v600
      %v602 = vpop.f32.mrf.mxu0
      %v603 = vpop.f32.mrf.mxu0
      %v604 = vadd.f32 0.0, %v603
      %v605 = vpop.f32.mrf.mxu0
      %606 = vmatprep.mubr.bf16.mxu0 0
      %607 = vmatmul.mubr.bf16.gmra.mxu0 %v389
      %v608 = vpop.f32.mrf.mxu0
      %v609 = vadd.f32 0.0, %v608
      %v610 = vpop.f32.mrf.mxu0
      %v611 = vpop.f32.mrf.mxu0
      %v612 = vadd.f32 0.0, %v611
      %v613 = vpop.f32.mrf.mxu0
      %614 = vdwg.mxu0
      %615 = vst [vmem:[%s247] sm:$0xff] %v489
      %616 = vst [vmem:[%s247 + $0x8] sm:$0xff] %v492
      %617 = vst [vmem:[%s247 + $0x10] sm:$0xff] %v497
      %618 = vst [vmem:[%s247 + $0x18] sm:$0xff] %v500
      %619 = vst [vmem:[%s247 + $0x20] sm:$0xff] %v505
      %620 = vst [vmem:[%s247 + $0x28] sm:$0xff] %v508
      %621 = vst [vmem:[%s247 + $0x30] sm:$0xff] %v513
      %622 = vst [vmem:[%s247 + $0x38] sm:$0xff] %v516
      %623 = vst [vmem:[%s247 + $0x40] sm:$0xff] %v521
      %624 = vst [vmem:[%s247 + $0x48] sm:$0xff] %v524
      %625 = vst [vmem:[%s247 + $0x50] sm:$0xff] %v529
      %626 = vst [vmem:[%s247 + $0x58] sm:$0xff] %v532
      %627 = vst [vmem:[%s247 + $0x60] sm:$0xff] %v537
      %628 = vst [vmem:[%s247 + $0x68] sm:$0xff] %v540
      %629 = vst [vmem:[%s247 + $0x70] sm:$0xff] %v545
      %630 = vst [vmem:[%s247 + $0x78] sm:$0xff] %v548
      %631 = vst [vmem:[%s247 + $0x80] sm:$0xff] %v553
      %632 = vst [vmem:[%s247 + $0x88] sm:$0xff] %v556
      %633 = vst [vmem:[%s247 + $0x90] sm:$0xff] %v561
      %634 = vst [vmem:[%s247 + $0x98] sm:$0xff] %v564
      %635 = vst [vmem:[%s247 + $0xa0] sm:$0xff] %v569
      %636 = vst [vmem:[%s247 + $0xa8] sm:$0xff] %v572
      %637 = vst [vmem:[%s247 + $0xb0] sm:$0xff] %v577
      %638 = vst [vmem:[%s247 + $0xb8] sm:$0xff] %v580
      %639 = vst [vmem:[%s247 + $0xc0] sm:$0xff] %v585
      %640 = vst [vmem:[%s247 + $0xc8] sm:$0xff] %v588
      %641 = vst [vmem:[%s247 + $0xd0] sm:$0xff] %v593
      %642 = vst [vmem:[%s247 + $0xd8] sm:$0xff] %v596
      %643 = vst [vmem:[%s247 + $0xe0] sm:$0xff] %v601
      %644 = vst [vmem:[%s247 + $0xe8] sm:$0xff] %v604
      %645 = vst [vmem:[%s247 + $0xf0] sm:$0xff] %v609
      %646 = vst [vmem:[%s247 + $0xf8] sm:$0xff] %v612
      %v647 = vld [vmem:[%s251] sm:$0x1]
      %v648 = vadd.f32 %v489, %v492
      %v649 = vadd.f32 %v648, %v497
      %v650 = vadd.f32 %v649, %v500
      %v651 = vadd.f32 %v650, %v505
      %v652 = vadd.f32 %v651, %v508
      %v653 = vadd.f32 %v652, %v513
      %v654 = vadd.f32 %v653, %v516
      %v655 = vadd.f32 %v654, %v521
      %v656 = vadd.f32 %v655, %v524
      %v657 = vadd.f32 %v656, %v529
      %v658 = vadd.f32 %v657, %v532
      %v659 = vadd.f32 %v658, %v537
      %v660 = vadd.f32 %v659, %v540
      %v661 = vadd.f32 %v660, %v545
      %v662 = vadd.f32 %v661, %v548
      %v663 = vadd.f32 %v662, %v553
      %v664 = vadd.f32 %v663, %v556
      %v665 = vadd.f32 %v664, %v561
      %v666 = vadd.f32 %v665, %v564
      %v667 = vadd.f32 %v666, %v569
      %v668 = vadd.f32 %v667, %v572
      %v669 = vadd.f32 %v668, %v577
      %v670 = vadd.f32 %v669, %v580
      %v671 = vadd.f32 %v670, %v585
      %v672 = vadd.f32 %v671, %v588
      %v673 = vadd.f32 %v672, %v593
      %v674 = vadd.f32 %v673, %v596
      %v675 = vadd.f32 %v674, %v601
      %v676 = vadd.f32 %v675, %v604
      %v677 = vadd.f32 %v676, %v609
      %v678 = vadd.f32 %v677, %v612
      %v679 = vrot.slane %v678, 4
      %v680 = vadd.f32 %v678, %v679
      %v681 = vrot.slane %v680, 2
      %v682 = vadd.f32 %v680, %v681
      %v683 = vrot.slane %v682, 1
      %v684 = vadd.f32 %v682, %v683
      %v685 = vadd.f32 %v647, %v684
      %686 = vst [vmem:[%s251] sm:$0x1] %v685
      %v687 = vld [vmem:[%s254] sm:$0x1]
      %v688 = vmul.f32 %v489, %v489
      %v689 = vmul.f32 %v492, %v492
      %v690 = vmul.f32 %v497, %v497
      %v691 = vmul.f32 %v500, %v500
      %v692 = vmul.f32 %v505, %v505
      %v693 = vmul.f32 %v508, %v508
      %v694 = vmul.f32 %v513, %v513
      %v695 = vmul.f32 %v516, %v516
      %v696 = vmul.f32 %v521, %v521
      %v697 = vmul.f32 %v524, %v524
      %v698 = vmul.f32 %v529, %v529
      %v699 = vmul.f32 %v532, %v532
      %v700 = vmul.f32 %v537, %v537
      %v701 = vmul.f32 %v540, %v540
      %v702 = vmul.f32 %v545, %v545
      %v703 = vmul.f32 %v548, %v548
      %v704 = vmul.f32 %v553, %v553
      %v705 = vmul.f32 %v556, %v556
      %v706 = vmul.f32 %v561, %v561
      %v707 = vmul.f32 %v564, %v564
      %v708 = vmul.f32 %v569, %v569
      %v709 = vmul.f32 %v572, %v572
      %v710 = vmul.f32 %v577, %v577
      %v711 = vmul.f32 %v580, %v580
      %v712 = vmul.f32 %v585, %v585
      %v713 = vmul.f32 %v588, %v588
      %v714 = vmul.f32 %v593, %v593
      %v715 = vmul.f32 %v596, %v596
      %v716 = vmul.f32 %v601, %v601
      %v717 = vmul.f32 %v604, %v604
      %v718 = vmul.f32 %v609, %v609
      %v719 = vmul.f32 %v612, %v612
      %v720 = vadd.f32 %v688, %v689
      %v721 = vadd.f32 %v720, %v690
      %v722 = vadd.f32 %v721, %v691
      %v723 = vadd.f32 %v722, %v692
      %v724 = vadd.f32 %v723, %v693
      %v725 = vadd.f32 %v724, %v694
      %v726 = vadd.f32 %v725, %v695
      %v727 = vadd.f32 %v726, %v696
      %v728 = vadd.f32 %v727, %v697
      %v729 = vadd.f32 %v728, %v698
      %v730 = vadd.f32 %v729, %v699
      %v731 = vadd.f32 %v730, %v700
      %v732 = vadd.f32 %v731, %v701
      %v733 = vadd.f32 %v732, %v702
      %v734 = vadd.f32 %v733, %v703
      %v735 = vadd.f32 %v734, %v704
      %v736 = vadd.f32 %v735, %v705
      %v737 = vadd.f32 %v736, %v706
      %v738 = vadd.f32 %v737, %v707
      %v739 = vadd.f32 %v738, %v708
      %v740 = vadd.f32 %v739, %v709
      %v741 = vadd.f32 %v740, %v710
      %v742 = vadd.f32 %v741, %v711
      %v743 = vadd.f32 %v742, %v712
      %v744 = vadd.f32 %v743, %v713
      %v745 = vadd.f32 %v744, %v714
      %v746 = vadd.f32 %v745, %v715
      %v747 = vadd.f32 %v746, %v716
      %v748 = vadd.f32 %v747, %v717
      %v749 = vadd.f32 %v748, %v718
      %v750 = vadd.f32 %v749, %v719
      %v751 = vrot.slane %v750, 4
      %v752 = vadd.f32 %v750, %v751
      %v753 = vrot.slane %v752, 2
      %v754 = vadd.f32 %v752, %v753
      %v755 = vrot.slane %v754, 1
      %v756 = vadd.f32 %v754, %v755
      %v757 = vadd.f32 %v687, %v756
      %758 = vst [vmem:[%s254] sm:$0x1] %v757
      %s759 = smul.u32 32, %s21
      %p760 = scmp.lt.s32.totalorder %s759, 63
      %s761 = scalar_select %p760, %s759, 63
      %p762 = scmp.lt.s32.totalorder %s20, 0
      %s763 = scalar_select %p762, %s20, 0
      %s764 = sadd.s32 %s763, %s761
      %s765 = smul.addr %s764, 8
      %s766 = scalar_lea.vmem %s2, %s765
      %p767 = scmp.lt.s32.totalorder %s20, 0
      %s768 = scalar_select %p767, %s20, 0
      %s769 = scalar_lea.vmem %s3, %s768
      %p770 = scmp.lt.s32.totalorder %s20, 0
      %s771 = scalar_select %p770, %s20, 0
      %s772 = scalar_lea.vmem %s4, %s771
      // Predicated region
      $region33: #{unet_block_forward.4} parent=27 // pred_check
        %p773 = pneg %p100
      $region34: #{unet_block_forward.4} parent=27 // pred_check_branch
        %775 = sbr.rel (%p773) target = $region36
      $region35: #{unet_block_forward.4} parent=27 // pred_region
        %s776 = smul.u32 32, %s21
      $region36: #{unet_block_forward.4} parent=27 // pred_fallthru
        _
      // Predicated region
      $region37: #{unet_block_forward.4} parent=27 // pred_check
        %p777 = pneg %p126
      $region38: #{unet_block_forward.4} parent=27 // pred_check_branch
        %779 = sbr.rel (%p777) target = $region40
      $region39: #{unet_block_forward.4} parent=27 // pred_region
        _
      $region40: #{unet_block_forward.4} parent=27 // pred_fallthru
        _
      // Predicated region
      $region41: #{unet_block_forward.4} parent=27 // pred_check
        %p780 = pneg %p152
      $region42: #{unet_block_forward.4} parent=27 // pred_check_branch
        %782 = sbr.rel (%p780) target = $region44
      $region43: #{unet_block_forward.4} parent=27 // pred_region
        _
      $region44: #{unet_block_forward.4} parent=27 // pred_fallthru
        _
      // Predicated region
      $region45: #{unet_block_forward.4} parent=27 // pred_check
        %p783 = pneg %p126
      $region46: #{unet_block_forward.4} parent=27 // pred_check_branch
        %785 = sbr.rel (%p783) target = $region48
      $region47: #{unet_block_forward.4} parent=27 // pred_region
        %p786 = scmp.lt.s32.totalorder %s20, 0
        %s787 = scalar_select %p786, %s20, 0
        %s788 = scalar_lea.vmem %s3, %s787
      $region48: #{unet_block_forward.4} parent=27 // pred_fallthru
        _
      // Predicated region
      $region49: #{unet_block_forward.4} parent=27 // pred_check
        %p789 = pneg %p152
      $region50: #{unet_block_forward.4} parent=27 // pred_check_branch
        %791 = sbr.rel (%p789) target = $region52
      $region51: #{unet_block_forward.4} parent=27 // pred_region
        %p792 = scmp.lt.s32.totalorder %s20, 0
        %s793 = scalar_select %p792, %s20, 0
        %s794 = scalar_lea.vmem %s4, %s793
      $region52: #{unet_block_forward.4} parent=27 // pred_fallthru
        _
    $region28: #{unet_block_forward.4} parent=5 // pred_fallthru
      _
    %p795 = scmp.le.s32.totalorder 2, %s11
    // Predicated region
    $region53: #{unet_block_forward.4} parent=5 // pred_check
      %p796 = pneg %p795
    $region54: #{unet_block_forward.4} parent=5 // pred_check_branch
      %798 = sbr.rel (%p796) target = $region56
    $region55: #{unet_block_forward.4} parent=5 // pred_region
      %s799 = ssub.s32 %s11, 2
      // Predicated region
      $region57: #{unet_block_forward.4} parent=55 // pred_check
        %p800 = pneg %p106
      $region58: #{unet_block_forward.4} parent=55 // pred_check_branch
        %802 = sbr.rel (%p800) target = $region60
      $region59: #{unet_block_forward.4} parent=55 // pred_region
        %s803 = smul.u32 32, %s23
        %p804 = scmp.lt.s32.totalorder %s803, 63
        %s805 = scalar_select %p804, %s803, 63
        %p806 = scmp.lt.s32.totalorder %s22, 0
        %s807 = scalar_select %p806, %s22, 0
        %s808 = sadd.s32 %s807, %s805
        %s809 = smul.addr %s808, 8
        %s810 = scalar_lea.vmem %s2, %s809
      $region60: #{unet_block_forward.4} parent=55 // pred_fallthru
        _
    $region56: #{unet_block_forward.4} parent=5 // pred_fallthru
      _
  $region6: #{unet_block_forward.4} parent=0 // loop_footer
    %s15 = sadd.s32 1, %s11
  $region7: #{unet_block_forward.4} parent=0 // loop_footer_branch
    %10 = sbr.rel target = $region3
  $region8: #{unet_block_forward.4} parent=0 // loop_exit
    _

// kernel: unet_block_forward.7
$region0: #{unet_block_forward.7}
  #allocation0 [shape = 'u32[]', space=smem, size = 0x4, offset = 0x4, fixed_abs, tag = 'smem constant byte address 0x4 - core index']
  #allocation1 [shape = 'u32[144,128]{1,0:T(1,128)}', space=vmem, size = 0x12000, scoped, tag = 'internal scratch']
  %s0 = inlined_call_operand.vmem [shape: f32[512,128], index: 0, kind: input, shape index: {}]
  %s1 = inlined_call_operand.vmem [shape: f32[1,128], index: 1, kind: input, shape index: {}]
  %s2 = inlined_call_operand.vmem [shape: f32[1,128], index: 2, kind: input, shape index: {}]
  %s3 = inlined_call_operand.vmem [shape: f32[512,128], index: 3, kind: output, shape index: {}]
  %s4 = sld [smem:[#allocation0]]
  $region45: #{unet_block_forward.7} parent=0
    _
  %s6 = ssub.s32 1, %s4
  %s7 = scalar_select 0, %s6, %s4
  loop: start=0, step=1, limit=4
  $region2: #{unet_block_forward.7} parent=0 // loop_pre_header
    _
  $region3: #{unet_block_forward.7} parent=0 // loop_header
    %s9 = sphi 0, %s13
    %p10 = scmp.ge.s32.totalorder %s9, 4
    %s16 = sphi 0, %s28
    %s17 = sphi 0, %s24
    %s18 = sphi 0, %s16
    %s19 = sphi 0, %s17
    %s20 = sphi 0, %s18
    %s21 = sphi 0, %s19
    %s33 = sphi 0, %s35
    %s36 = sphi 0, %s33
    %s37 = sphi 0, %s36
    %s53 = sphi 0, %s37
    %s59 = sphi 0, %s61
    %s62 = sphi 0, %s59
    %s63 = sphi 0, %s62
    %s79 = sphi 0, %s63
    %s85 = sphi 0, %s87
    %s88 = sphi 0, %s85
    %s89 = sphi 0, %s88
    %s105 = sphi 0, %s89
    %s113 = sphi 0, %s115
    %s116 = sphi 0, %s113
    %s117 = sphi 0, %s116
    %s133 = sphi 0, %s117
  $region4: #{unet_block_forward.7} parent=0 // loop_header_branch
    %12 = sbr.rel (%p10) target = $region8
  $region5: #{unet_block_forward.7} parent=0 // loop_body
    %s14 = ssub.s32 %s9, 1
    %s15 = ssub.s32 %s9, 2
    %s22 = sadd.s32 1, %s17
    %p23 = scmp.ge.s32.totalorder %s22, 2
    %s24 = scalar_select %p23, 0, %s22
    %s25 = sadd.s32 1, %s16
    %s26 = scalar_select %p23, %s25, %s16
    %p27 = scmp.ge.s32.totalorder %s26, 1
    %s28 = scalar_select %p27, 0, %s26
    %s29 = ssub.s32 %s17, %s24
    %s30 = ssub.s32 %s16, %s28
    %s31 = sor.u32 %s29, %s30
    %p32 = scmp.eq.s32.totalorder %s31, 0
    %s34 = sadd.s32 %s33, 1
    %s35 = scalar_select %p32, %s33, %s34
    %p38 = pneg %p32
    %p39 = scmp.eq.s32.totalorder %s9, 1
    %p40 = por %p38, %p39
    %p41 = scmp.ne.s32.totalorder %s33, %s36
    %p42 = scmp.eq.s32.totalorder %s9, 0
    %p43 = por %p41, %p42
    %p44 = scmp.ne.s32.totalorder %s33, %s36
    %p45 = scmp.eq.s32.totalorder %s14, 1
    %p46 = por %p44, %p45
    %p47 = scmp.ne.s32.totalorder %s36, %s37
    %p48 = scmp.eq.s32.totalorder %s14, 0
    %p49 = por %p47, %p48
    %p50 = scmp.ne.s32.totalorder %s36, %s37
    %p51 = scmp.eq.s32.totalorder %s15, 1
    %p52 = por %p50, %p51
    %p54 = scmp.ne.s32.totalorder %s37, %s53
    %p55 = scmp.eq.s32.totalorder %s15, 0
    %p56 = por %p54, %p55
    %s57 = ssub.s32 %s16, %s28
    %p58 = scmp.eq.s32.totalorder %s57, 0
    %s60 = sadd.s32 %s59, 1
    %s61 = scalar_select %p58, %s59, %s60
    %p64 = pneg %p58
    %p65 = scmp.eq.s32.totalorder %s9, 1
    %p66 = por %p64, %p65
    %p67 = scmp.ne.s32.totalorder %s59, %s62
    %p68 = scmp.eq.s32.totalorder %s9, 0
    %p69 = por %p67, %p68
    %p70 = scmp.ne.s32.totalorder %s59, %s62
    %p71 = scmp.eq.s32.totalorder %s14, 1
    %p72 = por %p70, %p71
    %p73 = scmp.ne.s32.totalorder %s62, %s63
    %p74 = scmp.eq.s32.totalorder %s14, 0
    %p75 = por %p73, %p74
    %p76 = scmp.ne.s32.totalorder %s62, %s63
    %p77 = scmp.eq.s32.totalorder %s15, 1
    %p78 = por %p76, %p77
    %p80 = scmp.ne.s32.totalorder %s63, %s79
    %p81 = scmp.eq.s32.totalorder %s15, 0
    %p82 = por %p80, %p81
    %s83 = ssub.s32 %s16, %s28
    %p84 = scmp.eq.s32.totalorder %s83, 0
    %s86 = sadd.s32 %s85, 1
    %s87 = scalar_select %p84, %s85, %s86
    %p90 = pneg %p84
    %p91 = scmp.eq.s32.totalorder %s9, 1
    %p92 = por %p90, %p91
    %p93 = scmp.ne.s32.totalorder %s85, %s88
    %p94 = scmp.eq.s32.totalorder %s9, 0
    %p95 = por %p93, %p94
    %p96 = scmp.ne.s32.totalorder %s85, %s88
    %p97 = scmp.eq.s32.totalorder %s14, 1
    %p98 = por %p96, %p97
    %p99 = scmp.ne.s32.totalorder %s88, %s89
    %p100 = scmp.eq.s32.totalorder %s14, 0
    %p101 = por %p99, %p100
    %p102 = scmp.ne.s32.totalorder %s88, %s89
    %p103 = scmp.eq.s32.totalorder %s15, 1
    %p104 = por %p102, %p103
    %p106 = scmp.ne.s32.totalorder %s89, %s105
    %p107 = scmp.eq.s32.totalorder %s15, 0
    %p108 = por %p106, %p107
    %s109 = ssub.s32 %s17, %s24
    %s110 = ssub.s32 %s16, %s28
    %s111 = sor.u32 %s109, %s110
    %p112 = scmp.eq.s32.totalorder %s111, 0
    %s114 = sadd.s32 %s113, 1
    %s115 = scalar_select %p112, %s113, %s114
    %p118 = pneg %p112
    %p119 = scmp.eq.s32.totalorder %s9, 1
    %p120 = por %p118, %p119
    %p121 = scmp.ne.s32.totalorder %s113, %s116
    %p122 = scmp.eq.s32.totalorder %s9, 0
    %p123 = por %p121, %p122
    %p124 = scmp.ne.s32.totalorder %s113, %s116
    %p125 = scmp.eq.s32.totalorder %s14, 1
    %p126 = por %p124, %p125
    %p127 = scmp.ne.s32.totalorder %s116, %s117
    %p128 = scmp.eq.s32.totalorder %s14, 0
    %p129 = por %p127, %p128
    %p130 = scmp.ne.s32.totalorder %s116, %s117
    %p131 = scmp.eq.s32.totalorder %s15, 1
    %p132 = por %p130, %p131
    %p134 = scmp.ne.s32.totalorder %s117, %s133
    %p135 = scmp.eq.s32.totalorder %s15, 0
    %p136 = por %p134, %p135
    %p137 = scmp.le.s32.totalorder 1, %s9
    %p138 = scmp.lt.s32.totalorder %s9, 3
    %p139 = pnand %p137, %p138
    %p140 = pneg %p139
    // Predicated region
    $region9: #{unet_block_forward.7} parent=5 // pred_check
      _
    $region10: #{unet_block_forward.7} parent=5 // pred_check_branch
      %142 = sbr.rel (%p139) target = $region12
    $region11: #{unet_block_forward.7} parent=5 // pred_region
      %s143 = ssub.s32 %s9, 1
      // Predicated region
      $region13: #{unet_block_forward.7} parent=11 // pred_check
        %p144 = pneg %p75
      $region14: #{unet_block_forward.7} parent=11 // pred_check_branch
        %146 = sbr.rel (%p144) target = $region16
      $region15: #{unet_block_forward.7} parent=11 // pred_region
        %p147 = scmp.lt.s32.totalorder %s18, 0
        %s148 = scalar_select %p147, %s18, 0
        %s149 = scalar_lea.vmem %s1, %s148
      $region16: #{unet_block_forward.7} parent=11 // pred_fallthru
        _
      // Predicated region
      $region17: #{unet_block_forward.7} parent=11 // pred_check
        %p150 = pneg %p101
      $region18: #{unet_block_forward.7} parent=11 // pred_check_branch
        %152 = sbr.rel (%p150) target = $region20
      $region19: #{unet_block_forward.7} parent=11 // pred_region
        %p153 = scmp.lt.s32.totalorder %s18, 0
        %s154 = scalar_select %p153, %s18, 0
        %s155 = scalar_lea.vmem %s2, %s154
      $region20: #{unet_block_forward.7} parent=11 // pred_fallthru
        _
    $region12: #{unet_block_forward.7} parent=5 // pred_fallthru
      _
    %p156 = scmp.lt.s32.totalorder %s9, 2
    // Predicated region
    $region21: #{unet_block_forward.7} parent=5 // pred_check
      %p157 = pneg %p156
    $region22: #{unet_block_forward.7} parent=5 // pred_check_branch
      %159 = sbr.rel (%p157) target = $region24
    $region23: #{unet_block_forward.7} parent=5 // pred_region
      // Predicated region
      $region25: #{unet_block_forward.7} parent=23 // pred_check
        %p160 = pneg %p43
      $region26: #{unet_block_forward.7} parent=23 // pred_check_branch
        %162 = sbr.rel (%p160) target = $region28
      $region27: #{unet_block_forward.7} parent=23 // pred_region
        %s163 = smul.u32 32, %s17
        %p164 = scmp.lt.s32.totalorder %s163, 63
        %s165 = scalar_select %p164, %s163, 63
        %p166 = scmp.lt.s32.totalorder %s16, 0
        %s167 = scalar_select %p166, %s16, 0
        %s168 = sadd.s32 %s167, %s165
        %s169 = smul.addr %s168, 8
        %s170 = scalar_lea.vmem %s0, %s169
        %s171 = smul.u32 32, %s17
      $region28: #{unet_block_forward.7} parent=23 // pred_fallthru
        _
    $region24: #{unet_block_forward.7} parent=5 // pred_fallthru
      _
    %p172 = scmp.le.s32.totalorder 1, %s9
    %p173 = scmp.lt.s32.totalorder %s9, 3
    %p174 = pnand %p172, %p173
    %p175 = pneg %p174
    // Predicated region
    $region29: #{unet_block_forward.7} parent=5 // pred_check
      _
    $region30: #{unet_block_forward.7} parent=5 // pred_check_branch
      %177 = sbr.rel (%p174) target = $region32
    $region31: #{unet_block_forward.7} parent=5 // pred_region
      %s178 = ssub.s32 %s9, 1
      %s179 = smul.u32 32, %s19
      %p180 = scmp.lt.s32.totalorder %s179, 63
      %s181 = scalar_select %p180, %s179, 63
      %p182 = scmp.lt.s32.totalorder %s18, 0
      %s183 = scalar_select %p182, %s18, 0
      %s184 = sadd.s32 %s183, %s181
      %s185 = smul.addr %s184, 8
      %s186 = scalar_lea.vmem %s0, %s185
      %p187 = pneg %p49
      %p188 = pneg %p46
      %p189 = scmp.lt.s32.totalorder %s18, 0
      %s190 = scalar_select %p189, %s18, 0
      %s191 = scalar_lea.vmem %s1, %s190
      %p192 = pneg %p75
      %p193 = pneg %p72
      %p194 = scmp.lt.s32.totalorder %s18, 0
      %s195 = scalar_select %p194, %s18, 0
      %s196 = scalar_lea.vmem %s2, %s195
      %p197 = pneg %p101
      %p198 = pneg %p98
      %p199 = pneg %p129
      %p200 = pneg %p126
      %s201 = smul.u32 32, %s19
      %p202 = scmp.lt.s32.totalorder %s201, 63
      %s203 = scalar_select %p202, %s201, 63
      %p204 = scmp.lt.s32.totalorder %s18, 0
      %s205 = scalar_select %p204, %s18, 0
      %s206 = sadd.s32 %s205, %s203
      %s207 = smul.addr %s206, 8
      %s208 = scalar_lea.vmem %s3, %s207
      %s209 = smul.u32 32, %s19
      %p210 = scmp.lt.s32.totalorder %s209, 63
      %s211 = scalar_select %p210, %s209, 63
      %p212 = scmp.lt.s32.totalorder %s18, 0
      %s213 = scalar_select %p212, %s18, 0
      %s214 = sadd.s32 %s213, %s211
      %s215 = smul.addr %s214, 8
      %s216 = scalar_lea.vmem %s0, %s215
      %s217 = smul.u32 32, %s19
      %p218 = scmp.lt.s32.totalorder %s18, 0
      %s219 = scalar_select %p218, %s18, 0
      %s220 = scalar_lea.vmem %s1, %s219
      %p221 = scmp.lt.s32.totalorder %s18, 0
      %s222 = scalar_select %p221, %s18, 0
      %s223 = scalar_lea.vmem %s2, %s222
      %s224 = smul.u32 32, %s19
      %p225 = scmp.lt.s32.totalorder %s224, 63
      %s226 = scalar_select %p225, %s224, 63
      %p227 = scmp.lt.s32.totalorder %s18, 0
      %s228 = scalar_select %p227, %s18, 0
      %s229 = sadd.s32 %s228, %s226
      %s230 = smul.addr %s229, 8
      %s231 = scalar_lea.vmem %s3, %s230
      %s232 = smul.u32 32, %s19
      %v233 = vld [vmem:[%s216] sm:$0xff]
      %v234 = vld [vmem:[%s216 + $0x8] sm:$0xff]
      %v235 = vld [vmem:[%s216 + $0x10] sm:$0xff]
      %v236 = vld [vmem:[%s216 + $0x18] sm:$0xff]
      %v237 = vld [vmem:[%s216 + $0x20] sm:$0xff]
      %v238 = vld [vmem:[%s216 + $0x28] sm:$0xff]
      %v239 = vld [vmem:[%s216 + $0x30] sm:$0xff]
      %v240 = vld [vmem:[%s216 + $0x38] sm:$0xff]
      %v241 = vld [vmem:[%s216 + $0x40] sm:$0xff]
      %v242 = vld [vmem:[%s216 + $0x48] sm:$0xff]
      %v243 = vld [vmem:[%s216 + $0x50] sm:$0xff]
      %v244 = vld [vmem:[%s216 + $0x58] sm:$0xff]
      %v245 = vld [vmem:[%s216 + $0x60] sm:$0xff]
      %v246 = vld [vmem:[%s216 + $0x68] sm:$0xff]
      %v247 = vld [vmem:[%s216 + $0x70] sm:$0xff]
      %v248 = vld [vmem:[%s216 + $0x78] sm:$0xff]
      %v249 = vld [vmem:[%s216 + $0x80] sm:$0xff]
      %v250 = vld [vmem:[%s216 + $0x88] sm:$0xff]
      %v251 = vld [vmem:[%s216 + $0x90] sm:$0xff]
      %v252 = vld [vmem:[%s216 + $0x98] sm:$0xff]
      %v253 = vld [vmem:[%s216 + $0xa0] sm:$0xff]
      %v254 = vld [vmem:[%s216 + $0xa8] sm:$0xff]
      %v255 = vld [vmem:[%s216 + $0xb0] sm:$0xff]
      %v256 = vld [vmem:[%s216 + $0xb8] sm:$0xff]
      %v257 = vld [vmem:[%s216 + $0xc0] sm:$0xff]
      %v258 = vld [vmem:[%s216 + $0xc8] sm:$0xff]
      %v259 = vld [vmem:[%s216 + $0xd0] sm:$0xff]
      %v260 = vld [vmem:[%s216 + $0xd8] sm:$0xff]
      %v261 = vld [vmem:[%s216 + $0xe0] sm:$0xff]
      %v262 = vld [vmem:[%s216 + $0xe8] sm:$0xff]
      %v263 = vld [vmem:[%s216 + $0xf0] sm:$0xff]
      %v264 = vld [vmem:[%s216 + $0xf8] sm:$0xff]
      %v265 = vld [vmem:[%s220] sm:$0x1]
      %v267 = vlaneseq
      %v268 = vshrl.u32 %v267, 7
      %v269 = vsub.s32 0, %v268
      %v270 = vrot.slane %v265, %v269
      %v272 = vmul.f32 %v233, %v270
      %v273 = vmul.f32 %v234, %v270
      %v274 = vmul.f32 %v235, %v270
      %v275 = vmul.f32 %v236, %v270
      %v276 = vmul.f32 %v237, %v270
      %v277 = vmul.f32 %v238, %v270
      %v278 = vmul.f32 %v239, %v270
      %v279 = vmul.f32 %v240, %v270
      %v280 = vmul.f32 %v241, %v270
      %v281 = vmul.f32 %v242, %v270
      %v282 = vmul.f32 %v243, %v270
      %v283 = vmul.f32 %v244, %v270
      %v284 = vmul.f32 %v245, %v270
      %v285 = vmul.f32 %v246, %v270
      %v286 = vmul.f32 %v247, %v270
      %v287 = vmul.f32 %v248, %v270
      %v288 = vmul.f32 %v249, %v270
      %v289 = vmul.f32 %v250, %v270
      %v290 = vmul.f32 %v251, %v270
      %v291 = vmul.f32 %v252, %v270
      %v292 = vmul.f32 %v253, %v270
      %v293 = vmul.f32 %v254, %v270
      %v294 = vmul.f32 %v255, %v270
      %v295 = vmul.f32 %v256, %v270
      %v296 = vmul.f32 %v257, %v270
      %v297 = vmul.f32 %v258, %v270
      %v298 = vmul.f32 %v259, %v270
      %v299 = vmul.f32 %v260, %v270
      %v300 = vmul.f32 %v261, %v270
      %v301 = vmul.f32 %v262, %v270
      %v302 = vmul.f32 %v263, %v270
      %v303 = vmul.f32 %v264, %v270
      %v304 = vld [vmem:[%s223] sm:$0x1]
      %v306 = vlaneseq
      %v307 = vshrl.u32 %v306, 7
      %v308 = vsub.s32 0, %v307
      %v309 = vrot.slane %v304, %v308
      %v311 = vadd.f32 %v272, %v309
      %v312 = vadd.f32 %v273, %v309
      %v313 = vadd.f32 %v274, %v309
      %v314 = vadd.f32 %v275, %v309
      %v315 = vadd.f32 %v276, %v309
      %v316 = vadd.f32 %v277, %v309
      %v317 = vadd.f32 %v278, %v309
      %v318 = vadd.f32 %v279, %v309
      %v319 = vadd.f32 %v280, %v309
      %v320 = vadd.f32 %v281, %v309
      %v321 = vadd.f32 %v282, %v309
      %v322 = vadd.f32 %v283, %v309
      %v323 = vadd.f32 %v284, %v309
      %v324 = vadd.f32 %v285, %v309
      %v325 = vadd.f32 %v286, %v309
      %v326 = vadd.f32 %v287, %v309
      %v327 = vadd.f32 %v288, %v309
      %v328 = vadd.f32 %v289, %v309
      %v329 = vadd.f32 %v290, %v309
      %v330 = vadd.f32 %v291, %v309
      %v331 = vadd.f32 %v292, %v309
      %v332 = vadd.f32 %v293, %v309
      %v333 = vadd.f32 %v294, %v309
      %v334 = vadd.f32 %v295, %v309
      %v335 = vadd.f32 %v296, %v309
      %v336 = vadd.f32 %v297, %v309
      %v337 = vadd.f32 %v298, %v309
      %v338 = vadd.f32 %v299, %v309
      %v339 = vadd.f32 %v300, %v309
      %v340 = vadd.f32 %v301, %v309
      %v341 = vadd.f32 %v302, %v309
      %v342 = vadd.f32 %v303, %v309
      %v343 = vmax.f32 %v311, 0.0
      %v344 = vmax.f32 %v312, 0.0
      %v345 = vmax.f32 %v313, 0.0
      %v346 = vmax.f32 %v314, 0.0
      %v347 = vmax.f32 %v315, 0.0
      %v348 = vmax.f32 %v316, 0.0
      %v349 = vmax.f32 %v317, 0.0
      %v350 = vmax.f32 %v318, 0.0
      %v351 = vmax.f32 %v319, 0.0
      %v352 = vmax.f32 %v320, 0.0
      %v353 = vmax.f32 %v321, 0.0
      %v354 = vmax.f32 %v322, 0.0
      %v355 = vmax.f32 %v323, 0.0
      %v356 = vmax.f32 %v324, 0.0
      %v357 = vmax.f32 %v325, 0.0
      %v358 = vmax.f32 %v326, 0.0
      %v359 = vmax.f32 %v327, 0.0
      %v360 = vmax.f32 %v328, 0.0
      %v361 = vmax.f32 %v329, 0.0
      %v362 = vmax.f32 %v330, 0.0
      %v363 = vmax.f32 %v331, 0.0
      %v364 = vmax.f32 %v332, 0.0
      %v365 = vmax.f32 %v333, 0.0
      %v366 = vmax.f32 %v334, 0.0
      %v367 = vmax.f32 %v335, 0.0
      %v368 = vmax.f32 %v336, 0.0
      %v369 = vmax.f32 %v337, 0.0
      %v370 = vmax.f32 %v338, 0.0
      %v371 = vmax.f32 %v339, 0.0
      %v372 = vmax.f32 %v340, 0.0
      %v373 = vmax.f32 %v341, 0.0
      %v374 = vmax.f32 %v342, 0.0
      %375 = vst [vmem:[%s231] sm:$0xff] %v343
      %376 = vst [vmem:[%s231 + $0x8] sm:$0xff] %v344
      %377 = vst [vmem:[%s231 + $0x10] sm:$0xff] %v345
      %378 = vst [vmem:[%s231 + $0x18] sm:$0xff] %v346
      %379 = vst [vmem:[%s231 + $0x20] sm:$0xff] %v347
      %380 = vst [vmem:[%s231 + $0x28] sm:$0xff] %v348
      %381 = vst [vmem:[%s231 + $0x30] sm:$0xff] %v349
      %382 = vst [vmem:[%s231 + $0x38] sm:$0xff] %v350
      %383 = vst [vmem:[%s231 + $0x40] sm:$0xff] %v351
      %384 = vst [vmem:[%s231 + $0x48] sm:$0xff] %v352
      %385 = vst [vmem:[%s231 + $0x50] sm:$0xff] %v353
      %386 = vst [vmem:[%s231 + $0x58] sm:$0xff] %v354
      %387 = vst [vmem:[%s231 + $0x60] sm:$0xff] %v355
      %388 = vst [vmem:[%s231 + $0x68] sm:$0xff] %v356
      %389 = vst [vmem:[%s231 + $0x70] sm:$0xff] %v357
      %390 = vst [vmem:[%s231 + $0x78] sm:$0xff] %v358
      %391 = vst [vmem:[%s231 + $0x80] sm:$0xff] %v359
      %392 = vst [vmem:[%s231 + $0x88] sm:$0xff] %v360
      %393 = vst [vmem:[%s231 + $0x90] sm:$0xff] %v361
      %394 = vst [vmem:[%s231 + $0x98] sm:$0xff] %v362
      %395 = vst [vmem:[%s231 + $0xa0] sm:$0xff] %v363
      %396 = vst [vmem:[%s231 + $0xa8] sm:$0xff] %v364
      %397 = vst [vmem:[%s231 + $0xb0] sm:$0xff] %v365
      %398 = vst [vmem:[%s231 + $0xb8] sm:$0xff] %v366
      %399 = vst [vmem:[%s231 + $0xc0] sm:$0xff] %v367
      %400 = vst [vmem:[%s231 + $0xc8] sm:$0xff] %v368
      %401 = vst [vmem:[%s231 + $0xd0] sm:$0xff] %v369
      %402 = vst [vmem:[%s231 + $0xd8] sm:$0xff] %v370
      %403 = vst [vmem:[%s231 + $0xe0] sm:$0xff] %v371
      %404 = vst [vmem:[%s231 + $0xe8] sm:$0xff] %v372
      %405 = vst [vmem:[%s231 + $0xf0] sm:$0xff] %v373
      %406 = vst [vmem:[%s231 + $0xf8] sm:$0xff] %v374
      %s407 = smul.u32 32, %s19
      %p408 = scmp.lt.s32.totalorder %s407, 63
      %s409 = scalar_select %p408, %s407, 63
      %p410 = scmp.lt.s32.totalorder %s18, 0
      %s411 = scalar_select %p410, %s18, 0
      %s412 = sadd.s32 %s411, %s409
      %s413 = smul.addr %s412, 8
      %s414 = scalar_lea.vmem %s3, %s413
      // Predicated region
      $region33: #{unet_block_forward.7} parent=31 // pred_check
        %p415 = pneg %p126
      $region34: #{unet_block_forward.7} parent=31 // pred_check_branch
        %417 = sbr.rel (%p415) target = $region36
      $region35: #{unet_block_forward.7} parent=31 // pred_region
        %s418 = smul.u32 32, %s19
      $region36: #{unet_block_forward.7} parent=31 // pred_fallthru
        _
    $region32: #{unet_block_forward.7} parent=5 // pred_fallthru
      _
    %p419 = scmp.le.s32.totalorder 2, %s9
    // Predicated region
    $region37: #{unet_block_forward.7} parent=5 // pred_check
      %p420 = pneg %p419
    $region38: #{unet_block_forward.7} parent=5 // pred_check_branch
      %422 = sbr.rel (%p420) target = $region40
    $region39: #{unet_block_forward.7} parent=5 // pred_region
      %s423 = ssub.s32 %s9, 2
      // Predicated region
      $region41: #{unet_block_forward.7} parent=39 // pred_check
        %p424 = pneg %p132
      $region42: #{unet_block_forward.7} parent=39 // pred_check_branch
        %426 = sbr.rel (%p424) target = $region44
      $region43: #{unet_block_forward.7} parent=39 // pred_region
        %s427 = smul.u32 32, %s21
        %p428 = scmp.lt.s32.totalorder %s427, 63
        %s429 = scalar_select %p428, %s427, 63
        %p430 = scmp.lt.s32.totalorder %s20, 0
        %s431 = scalar_select %p430, %s20, 0
        %s432 = sadd.s32 %s431, %s429
        %s433 = smul.addr %s432, 8
        %s434 = scalar_lea.vmem %s3, %s433
      $region44: #{unet_block_forward.7} parent=39 // pred_fallthru
        _
    $region40: #{unet_block_forward.7} parent=5 // pred_fallthru
      _
  $region6: #{unet_block_forward.7} parent=0 // loop_footer
    %s13 = sadd.s32 1, %s9
  $region7: #{unet_block_forward.7} parent=0 // loop_footer_branch
    %8 = sbr.rel target = $region3
  $region8: #{unet_block_forward.7} parent=0 // loop_exit
    _

</llo_original>
